<compile_context>
chip_gen: v7x
topology: tpu7x:2x2x1
jax: 0.10.0
libtpu: 0.0.40
codegen_flags: <defaults>
</compile_context>

<pallas_src>
import jax
import jax.numpy as jnp
import numpy as np
from jax.experimental import pallas as pl
from jax.experimental.pallas import tpu as pltpu

BN_EPS = 1e-5


def _encoder_kernel(xp_ref, w1_ref, w2_ref, g1_ref, b1_ref, g2_ref, b2_ref,
                    r1_ref, br1_ref, r2_ref, br2_ref,
                    out_ref, h1p_ref):
    N, Hp2, WpCmid = h1p_ref.shape
    H = Hp2 - 2
    Cmid, WCmid = br1_ref.shape
    W = WCmid // Cmid
    Cout, WCout = br2_ref.shape
    NH = N * H
    Hout = H // 2
    WoCout = WCout // 2
    inv_cnt = 1.0 / float(N * H * W)

    def bn_relu(acc, rmat_ref, bmat_ref, gamma_ref, beta_ref):
        # acc: (N*H, W*C) f32 conv output in lane-folded layout.
        # Batched one-pass batch stats (training mode, biased variance):
        # one (2, W*C) x (W*C, C) fold dot + one (2, C) x (C, W*C) broadcast
        # dot instead of four M=1 matmuls.
        rsum = jnp.sum(acc, axis=0, keepdims=True)                # (1, W*C)
        rsumsq = jnp.sum(acc * acc, axis=0, keepdims=True)        # (1, W*C)
        stats = jnp.concatenate([rsum, rsumsq], axis=0)           # (2, W*C)
        cstats = jnp.dot(stats, rmat_ref[...],
                         preferred_element_type=jnp.float32)      # (2, C)
        mean = cstats[0:1, :] * inv_cnt
        var = cstats[1:2, :] * inv_cnt - mean * mean
        scale = gamma_ref[...] * jax.lax.rsqrt(var + BN_EPS)      # (1, C)
        shift = beta_ref[...] - mean * scale                      # (1, C)
        ss = jnp.concatenate([scale, shift], axis=0)              # (2, C)
        ss_l = jnp.dot(ss, bmat_ref[...],
                       preferred_element_type=jnp.float32)        # (2, W*C)
        return jnp.maximum(acc * ss_l[0:1, :] + ss_l[1:2, :], 0.0)

    # ---- conv1: three accumulated bf16 dots, patches are pre-shifted ----
    acc1 = jnp.dot(xp_ref[0], w1_ref[0], preferred_element_type=jnp.float32)
    for ky in (1, 2):
        acc1 = acc1 + jnp.dot(xp_ref[ky], w1_ref[ky],
                              preferred_element_type=jnp.float32)
    h1 = bn_relu(acc1, r1_ref, br1_ref, g1_ref, b1_ref)           # (N*H, W*Cmid)

    # ---- splice conv1 output into the padded scratch; every element of the
    #      scratch is written exactly once (no concat, no zero-fill+rewrite) --
    h1_3d = h1.reshape(N, H, WCmid)
    zrow = jnp.zeros((N, 1, WpCmid), jnp.float32)
    zcol = jnp.zeros((N, H, Cmid), jnp.float32)
    h1p_ref[:, 0:1, :] = zrow                                     # top row halo
    h1p_ref[:, H + 1:H + 2, :] = zrow                             # bottom row halo
    h1p_ref[:, 1:H + 1, 0:Cmid] = zcol                            # left lane halo
    h1p_ref[:, 1:H + 1, (W + 1) * Cmid:WpCmid] = zcol             # right lane halo
    h1p_ref[:, 1:H + 1, Cmid:(W + 1) * Cmid] = h1_3d              # interior

    # ---- conv2: three accumulated bf16 dots over the padded scratch ----
    acc2 = None
    for ky in range(3):
        p = h1p_ref[:, ky:ky + H, :].reshape(NH, WpCmid).astype(jnp.bfloat16)
        d = jnp.dot(p, w2_ref[ky], preferred_element_type=jnp.float32)
        acc2 = d if acc2 is None else acc2 + d
    h2 = bn_relu(acc2, r2_ref, br2_ref, g2_ref, b2_ref)           # (N*H, W*Cout)

    # ---- MaxPool2d(2, ceil_mode): H-pool = sublane-pair max, W-pool = half-
    #      lane max (conv2 lanes are in (w-parity, wout, c) order). No
    #      selection matmuls. (H, W even here; see assert in the wrapper.) ----
    rp = jnp.max(h2.reshape(N * Hout, 2, WCout), axis=1)          # (N*Hout, W*Cout)
    out_ref[...] = jnp.maximum(rp[:, :WoCout], rp[:, WoCout:])    # (N*Hout, Wout*Cout)


def _banded_conv_weights(w_oihw, width, pool_split=False):
    """(Cout, Cin, 3, 3) -> (3, (width+2)*Cin, width*Cout) per-ky banded im2col
    weight bands absorbing the kx taps and the channel contraction.

    Band-ky row index = wi*Cin + ci over the lane-folded padded input row;
    column index = wo*Cout + co of the lane-folded output.  With
    pool_split=True the columns are permuted to (wo%2, wo//2, co) so the
    2-wide W maxpool becomes a half-lane max inside the kernel.
    """
    cout, cin, kh, kw = w_oihw.shape
    assert kh == 3 and kw == 3
    w_k = jnp.transpose(w_oihw.astype(jnp.float32), (2, 3, 1, 0))  # (ky,kx,Ci,Co)
    wi = jnp.arange(width + 2)
    wo = jnp.arange(width)
    kx = wi[:, None] - wo[None, :]                                 # (W+2, W)
    valid = ((kx >= 0) & (kx <= 2)).astype(jnp.float32)
    band = w_k[:, jnp.clip(kx, 0, 2), :, :]                        # (3,W+2,W,Ci,Co)
    band = band * valid[None, :, :, None, None]
    band = jnp.transpose(band, (0, 1, 3, 2, 4))                    # (3,W+2,Ci,W,Co)
    if pool_split:
        band = band.reshape(3, width + 2, cin, width // 2, 2, cout)
        band = jnp.transpose(band, (0, 1, 2, 4, 3, 5))             # (...,2,W/2,Co)
    return band.reshape(3, (width + 2) * cin, width * cout)


def encoder_forward(x_nchw, params):
    """x_nchw: (N, Cin, H, W) float32. Returns (N, Cout, H//2, W//2)."""
    w1, g1, b1, w2, g2, b2 = params
    N, Cin, H, W = x_nchw.shape
    Cmid, Cout = w1.shape[0], w2.shape[0]
    # TODO(synk): odd H/W with ceil_mode=True would need -inf edge padding.
    assert H % 2 == 0 and W % 2 == 0, "kernel exercises even spatial sizes only"
    Hout, Wout = H // 2, W // 2

    # NCHW -> lane-folded padded slab, then the three ky-shifted conv1 patches
    # are built here (layout plumbing done once by XLA): (3, N*H, (W+2)*Cin)
    # bf16, so the kernel only does aligned full loads.
    x = jnp.transpose(x_nchw, (0, 2, 3, 1)).astype(jnp.float32)
    xp = jnp.pad(x, ((0, 0), (1, 1), (1, 1), (0, 0)))
    xp = xp.reshape(N, H + 2, (W + 2) * Cin)
    xpk = jnp.stack(
        [xp[:, ky:ky + H, :].reshape(N * H, (W + 2) * Cin) for ky in range(3)],
        axis=0).astype(jnp.bfloat16)

    # per-ky banded im2col weights (bf16 MXU inputs); conv2's columns carry
    # the (parity, wout, c) permutation so the kernel's W-pool is lane-local.
    w1b = _banded_conv_weights(w1, W).astype(jnp.bfloat16)
    w2b = _banded_conv_weights(w2, W, pool_split=True).astype(jnp.bfloat16)

    g1r = g1.reshape(1, Cmid).astype(jnp.float32)
    b1r = b1.reshape(1, Cmid).astype(jnp.float32)
    g2r = g2.reshape(1, Cout).astype(jnp.float32)
    b2r = b2.reshape(1, Cout).astype(jnp.float32)

    # BN lane->channel fold and channel->lane broadcast matrices (f32 so the
    # batch statistics stay exact; lane%C == channel in both lane orders).
    r1 = jnp.tile(jnp.eye(Cmid, dtype=jnp.float32), (W, 1))        # (W*Cmid, Cmid)
    br1 = r1.T                                                     # (Cmid, W*Cmid)
    r2 = jnp.tile(jnp.eye(Cout, dtype=jnp.float32), (W, 1))        # (W*Cout, Cout)
    br2 = r2.T

    vmem = pl.BlockSpec(memory_space=pltpu.MemorySpace.VMEM)
    out2d = pl.pallas_call(
        _encoder_kernel,
        out_shape=jax.ShapeDtypeStruct((N * Hout, Wout * Cout), jnp.float32),
        in_specs=[vmem] * 11,
        out_specs=vmem,
        scratch_shapes=[
            pltpu.VMEM((N, H + 2, (W + 2) * Cmid), jnp.float32),   # padded conv1 out
        ],
    )(xpk, w1b, w2b, g1r, b1r, g2r, b2r, r1, br1, r2, br2)

    out_nhwc = out2d.reshape(N, Hout, Wout, Cout)
    return jnp.transpose(out_nhwc, (0, 3, 1, 2))  # back to NCHW


def reference_forward(x_nchw, params):
    """Pure-JAX f32 reference matching PyTorch training-mode forward."""
    w1, g1, b1, w2, g2, b2 = params
    x = jnp.transpose(x_nchw, (0, 2, 3, 1)).astype(jnp.float32)

    def block(x, w_oihw, g, b):
        w_hwio = jnp.transpose(w_oihw, (2, 3, 1, 0))
        y = jax.lax.conv_general_dilated(
            x, w_hwio, window_strides=(1, 1), padding="SAME",
            dimension_numbers=("NHWC", "HWIO", "NHWC"))
        mu = jnp.mean(y, axis=(0, 1, 2))
        var = jnp.mean((y - mu) ** 2, axis=(0, 1, 2))
        y = (y - mu) * jax.lax.rsqrt(var + BN_EPS) * g + b
        return jnp.maximum(y, 0.0)

    y = block(x, w1, g1, b1)
    y = block(y, w2, g2, b2)
    y = jax.lax.reduce_window(y, -jnp.inf, jax.lax.max,
                              (1, 2, 2, 1), (1, 2, 2, 1), "VALID")
    return jnp.transpose(y, (0, 3, 1, 2))


if __name__ == "__main__":
    # encoder(in_channels=4, out_channels=8) -> inner_channels = 4
    in_channels, out_channels = 4, 8
    inner_channels = out_channels // 2
    N, H, W = 2, 16, 16

    key = jax.random.PRNGKey(0)
    ks = jax.random.split(key, 7)
    x = jax.random.normal(ks[0], (N, in_channels, H, W), jnp.float32)
    w1 = 0.2 * jax.random.normal(ks[1], (inner_channels, in_channels, 3, 3), jnp.float32)
    w2 = 0.2 * jax.random.normal(ks[2], (out_channels, inner_channels, 3, 3), jnp.float32)
    g1 = 1.0 + 0.1 * jax.random.normal(ks[3], (inner_channels,), jnp.float32)
    b1 = 0.1 * jax.random.normal(ks[4], (inner_channels,), jnp.float32)
    g2 = 1.0 + 0.1 * jax.random.normal(ks[5], (out_channels,), jnp.float32)
    b2 = 0.1 * jax.random.normal(ks[6], (out_channels,), jnp.float32)
    params = (w1, g1, b1, w2, g2, b2)

    out = jax.block_until_ready(encoder_forward(x, params))
    ref = jax.block_until_ready(reference_forward(x, params))

    assert out.shape == (N, out_channels, H // 2, W // 2)
    # Tolerance covers bf16 MXU inputs for the two convs (reference is f32);
    # BN statistics / elementwise math are f32 in both.
    np.testing.assert_allclose(np.asarray(out), np.asarray(ref),
                               rtol=2e-2, atol=5e-2)
    print("KERNEL_OK")
</pallas_src>

<mosaic_0001>
module attributes {stable_mosaic.version = 11 : i64} {
  func.func @_encoder_kernel(%arg0: memref<3x32x72xbf16, #tpu.memory_space<vmem>>, %arg1: memref<3x72x64xbf16, #tpu.memory_space<vmem>>, %arg2: memref<3x72x128xbf16, #tpu.memory_space<vmem>>, %arg3: memref<1x4xf32, #tpu.memory_space<vmem>>, %arg4: memref<1x4xf32, #tpu.memory_space<vmem>>, %arg5: memref<1x8xf32, #tpu.memory_space<vmem>>, %arg6: memref<1x8xf32, #tpu.memory_space<vmem>>, %arg7: memref<64x4xf32, #tpu.memory_space<vmem>>, %arg8: memref<4x64xf32, #tpu.memory_space<vmem>>, %arg9: memref<128x8xf32, #tpu.memory_space<vmem>>, %arg10: memref<8x128xf32, #tpu.memory_space<vmem>>, %arg11: memref<16x64xf32, #tpu.memory_space<vmem>>, %arg12: memref<2x18x72xf32, #tpu.memory_space<vmem>>) attributes {dimension_semantics = [], scalar_prefetch = 0 : i64, scratch_operands = 1 : i64, tpu.core_type = #tpu.core_type<tc>} {
    %c0 = arith.constant 0 : index
    %c0_0 = arith.constant 0 : index
    %c0_1 = arith.constant 0 : index
    %0 = vector.load %arg0[%c0, %c0_0, %c0_1] : memref<3x32x72xbf16, #tpu.memory_space<vmem>>, vector<1x32x72xbf16>
    %1 = vector.shape_cast %0 : vector<1x32x72xbf16> to vector<32x72xbf16>
    %c0_2 = arith.constant 0 : index
    %c0_3 = arith.constant 0 : index
    %c0_4 = arith.constant 0 : index
    %2 = vector.load %arg1[%c0_2, %c0_3, %c0_4] : memref<3x72x64xbf16, #tpu.memory_space<vmem>>, vector<1x72x64xbf16>
    %3 = vector.shape_cast %2 : vector<1x72x64xbf16> to vector<72x64xbf16>
    %cst = arith.constant dense<0.000000e+00> : vector<32x64xf32>
    %4 = tpu.matmul %1, %3, %cst {dimension_numbers = #tpu.dot_dimension_numbers<[1], [0], [0], [1], [0, 0, 1, 1], [], []>} : vector<32x72xbf16>, vector<72x64xbf16>, vector<32x64xf32> -> vector<32x64xf32>
    %c1 = arith.constant 1 : index
    %c0_5 = arith.constant 0 : index
    %c0_6 = arith.constant 0 : index
    %5 = vector.load %arg0[%c1, %c0_5, %c0_6] : memref<3x32x72xbf16, #tpu.memory_space<vmem>>, vector<1x32x72xbf16>
    %6 = vector.shape_cast %5 : vector<1x32x72xbf16> to vector<32x72xbf16>
    %c1_7 = arith.constant 1 : index
    %c0_8 = arith.constant 0 : index
    %c0_9 = arith.constant 0 : index
    %7 = vector.load %arg1[%c1_7, %c0_8, %c0_9] : memref<3x72x64xbf16, #tpu.memory_space<vmem>>, vector<1x72x64xbf16>
    %8 = vector.shape_cast %7 : vector<1x72x64xbf16> to vector<72x64xbf16>
    %cst_10 = arith.constant dense<0.000000e+00> : vector<32x64xf32>
    %9 = tpu.matmul %6, %8, %cst_10 {dimension_numbers = #tpu.dot_dimension_numbers<[1], [0], [0], [1], [0, 0, 1, 1], [], []>} : vector<32x72xbf16>, vector<72x64xbf16>, vector<32x64xf32> -> vector<32x64xf32>
    %10 = arith.addf %4, %9 : vector<32x64xf32>
    %c2 = arith.constant 2 : index
    %c0_11 = arith.constant 0 : index
    %c0_12 = arith.constant 0 : index
    %11 = vector.load %arg0[%c2, %c0_11, %c0_12] : memref<3x32x72xbf16, #tpu.memory_space<vmem>>, vector<1x32x72xbf16>
    %12 = vector.shape_cast %11 : vector<1x32x72xbf16> to vector<32x72xbf16>
    %c2_13 = arith.constant 2 : index
    %c0_14 = arith.constant 0 : index
    %c0_15 = arith.constant 0 : index
    %13 = vector.load %arg1[%c2_13, %c0_14, %c0_15] : memref<3x72x64xbf16, #tpu.memory_space<vmem>>, vector<1x72x64xbf16>
    %14 = vector.shape_cast %13 : vector<1x72x64xbf16> to vector<72x64xbf16>
    %cst_16 = arith.constant dense<0.000000e+00> : vector<32x64xf32>
    %15 = tpu.matmul %12, %14, %cst_16 {dimension_numbers = #tpu.dot_dimension_numbers<[1], [0], [0], [1], [0, 0, 1, 1], [], []>} : vector<32x72xbf16>, vector<72x64xbf16>, vector<32x64xf32> -> vector<32x64xf32>
    %16 = arith.addf %10, %15 : vector<32x64xf32>
    %cst_17 = arith.constant dense<0.000000e+00> : vector<64xf32>
    %17 = vector.multi_reduction <add>, %16, %cst_17 [0] : vector<32x64xf32> to vector<64xf32>
    %18 = vector.shape_cast %17 : vector<64xf32> to vector<1x64xf32>
    %19 = arith.mulf %16, %16 : vector<32x64xf32>
    %cst_18 = arith.constant dense<0.000000e+00> : vector<64xf32>
    %20 = vector.multi_reduction <add>, %19, %cst_18 [0] : vector<32x64xf32> to vector<64xf32>
    %21 = vector.shape_cast %20 : vector<64xf32> to vector<1x64xf32>
    %22 = tpu.concatenate %18, %21 in 0 : vector<1x64xf32>, vector<1x64xf32> -> vector<2x64xf32>
    %c0_19 = arith.constant 0 : index
    %c0_20 = arith.constant 0 : index
    %23 = vector.load %arg7[%c0_19, %c0_20] : memref<64x4xf32, #tpu.memory_space<vmem>>, vector<64x4xf32>
    %cst_21 = arith.constant dense<0.000000e+00> : vector<2x4xf32>
    %24 = tpu.matmul %22, %23, %cst_21 {dimension_numbers = #tpu.dot_dimension_numbers<[1], [0], [0], [1], [0, 0, 1, 1], [], []>} : vector<2x64xf32>, vector<64x4xf32>, vector<2x4xf32> -> vector<2x4xf32>
    %25 = vector.extract_strided_slice %24 {offsets = [0, 0], sizes = [1, 4], strides = [1, 1]} : vector<2x4xf32> to vector<1x4xf32>
    %cst_22 = arith.constant 0.001953125 : f32
    %26 = vector.broadcast %cst_22 : f32 to vector<1x4xf32>
    %27 = arith.mulf %25, %26 : vector<1x4xf32>
    %28 = vector.extract_strided_slice %24 {offsets = [1, 0], sizes = [1, 4], strides = [1, 1]} : vector<2x4xf32> to vector<1x4xf32>
    %cst_23 = arith.constant 0.001953125 : f32
    %29 = vector.broadcast %cst_23 : f32 to vector<1x4xf32>
    %30 = arith.mulf %28, %29 : vector<1x4xf32>
    %31 = arith.mulf %27, %27 : vector<1x4xf32>
    %32 = arith.subf %30, %31 : vector<1x4xf32>
    %c0_24 = arith.constant 0 : index
    %c0_25 = arith.constant 0 : index
    %33 = vector.load %arg3[%c0_24, %c0_25] : memref<1x4xf32, #tpu.memory_space<vmem>>, vector<1x4xf32>
    %cst_26 = arith.constant 9.99999974E-6 : f32
    %34 = vector.broadcast %cst_26 : f32 to vector<1x4xf32>
    %35 = arith.addf %32, %34 : vector<1x4xf32>
    %36 = math.rsqrt %35 : vector<1x4xf32>
    %37 = arith.mulf %33, %36 : vector<1x4xf32>
    %c0_27 = arith.constant 0 : index
    %c0_28 = arith.constant 0 : index
    %38 = vector.load %arg4[%c0_27, %c0_28] : memref<1x4xf32, #tpu.memory_space<vmem>>, vector<1x4xf32>
    %39 = arith.mulf %27, %37 : vector<1x4xf32>
    %40 = arith.subf %38, %39 : vector<1x4xf32>
    %41 = tpu.concatenate %37, %40 in 0 : vector<1x4xf32>, vector<1x4xf32> -> vector<2x4xf32>
    %c0_29 = arith.constant 0 : index
    %c0_30 = arith.constant 0 : index
    %42 = vector.load %arg8[%c0_29, %c0_30] : memref<4x64xf32, #tpu.memory_space<vmem>>, vector<4x64xf32>
    %cst_31 = arith.constant dense<0.000000e+00> : vector<2x64xf32>
    %43 = tpu.matmul %41, %42, %cst_31 {dimension_numbers = #tpu.dot_dimension_numbers<[1], [0], [0], [1], [0, 0, 1, 1], [], []>} : vector<2x4xf32>, vector<4x64xf32>, vector<2x64xf32> -> vector<2x64xf32>
    %44 = vector.extract_strided_slice %43 {offsets = [0, 0], sizes = [1, 64], strides = [1, 1]} : vector<2x64xf32> to vector<1x64xf32>
    %45 = vector.broadcast %44 : vector<1x64xf32> to vector<32x64xf32>
    %46 = arith.mulf %16, %45 : vector<32x64xf32>
    %47 = vector.extract_strided_slice %43 {offsets = [1, 0], sizes = [1, 64], strides = [1, 1]} : vector<2x64xf32> to vector<1x64xf32>
    %48 = vector.broadcast %47 : vector<1x64xf32> to vector<32x64xf32>
    %49 = arith.addf %46, %48 : vector<32x64xf32>
    %cst_32 = arith.constant 0.000000e+00 : f32
    %50 = vector.broadcast %cst_32 : f32 to vector<32x64xf32>
    %51 = arith.maximumf %49, %50 : vector<32x64xf32>
    %52 = vector.shape_cast %51 : vector<32x64xf32> to vector<2x16x64xf32>
    %cst_33 = arith.constant 0.000000e+00 : f32
    %53 = vector.broadcast %cst_33 : f32 to vector<2x1x72xf32>
    %cst_34 = arith.constant 0.000000e+00 : f32
    %54 = vector.broadcast %cst_34 : f32 to vector<2x16x4xf32>
    %c0_35 = arith.constant 0 : index
    %c0_36 = arith.constant 0 : index
    %c0_37 = arith.constant 0 : index
    %55 = vector.load %arg12[%c0_35, %c0_36, %c0_37] : memref<2x18x72xf32, #tpu.memory_space<vmem>>, vector<2x1x72xf32>
    tpu.vector_store %arg12[%c0_35, %c0_36, %c0_37], %53 {strides = array<i32>} : memref<2x18x72xf32, #tpu.memory_space<vmem>>, vector<2x1x72xf32>,
    %c0_38 = arith.constant 0 : index
    %c17 = arith.constant 17 : index
    %c0_39 = arith.constant 0 : index
    %56 = vector.load %arg12[%c0_38, %c17, %c0_39] : memref<2x18x72xf32, #tpu.memory_space<vmem>>, vector<2x1x72xf32>
    tpu.vector_store %arg12[%c0_38, %c17, %c0_39], %53 {strides = array<i32>} : memref<2x18x72xf32, #tpu.memory_space<vmem>>, vector<2x1x72xf32>,
    %c0_40 = arith.constant 0 : index
    %c1_41 = arith.constant 1 : index
    %c0_42 = arith.constant 0 : index
    %57 = vector.load %arg12[%c0_40, %c1_41, %c0_42] : memref<2x18x72xf32, #tpu.memory_space<vmem>>, vector<2x16x4xf32>
    tpu.vector_store %arg12[%c0_40, %c1_41, %c0_42], %54 {strides = array<i32>} : memref<2x18x72xf32, #tpu.memory_space<vmem>>, vector<2x16x4xf32>,
    %c0_43 = arith.constant 0 : index
    %c1_44 = arith.constant 1 : index
    %c68 = arith.constant 68 : index
    %58 = vector.load %arg12[%c0_43, %c1_44, %c68] : memref<2x18x72xf32, #tpu.memory_space<vmem>>, vector<2x16x4xf32>
    tpu.vector_store %arg12[%c0_43, %c1_44, %c68], %54 {strides = array<i32>} : memref<2x18x72xf32, #tpu.memory_space<vmem>>, vector<2x16x4xf32>,
    %c0_45 = arith.constant 0 : index
    %c1_46 = arith.constant 1 : index
    %c4 = arith.constant 4 : index
    %59 = vector.load %arg12[%c0_45, %c1_46, %c4] : memref<2x18x72xf32, #tpu.memory_space<vmem>>, vector<2x16x64xf32>
    tpu.vector_store %arg12[%c0_45, %c1_46, %c4], %52 {strides = array<i32>} : memref<2x18x72xf32, #tpu.memory_space<vmem>>, vector<2x16x64xf32>,
    %c0_47 = arith.constant 0 : index
    %c0_48 = arith.constant 0 : index
    %c0_49 = arith.constant 0 : index
    %60 = vector.load %arg12[%c0_47, %c0_48, %c0_49] : memref<2x18x72xf32, #tpu.memory_space<vmem>>, vector<2x16x72xf32>
    %61 = vector.shape_cast %60 : vector<2x16x72xf32> to vector<32x72xf32>
    %62 = arith.truncf %61 : vector<32x72xf32> to vector<32x72xbf16>
    %c0_50 = arith.constant 0 : index
    %c0_51 = arith.constant 0 : index
    %c0_52 = arith.constant 0 : index
    %63 = vector.load %arg2[%c0_50, %c0_51, %c0_52] : memref<3x72x128xbf16, #tpu.memory_space<vmem>>, vector<1x72x128xbf16>
    %64 = vector.shape_cast %63 : vector<1x72x128xbf16> to vector<72x128xbf16>
    %cst_53 = arith.constant dense<0.000000e+00> : vector<32x128xf32>
    %65 = tpu.matmul %62, %64, %cst_53 {dimension_numbers = #tpu.dot_dimension_numbers<[1], [0], [0], [1], [0, 0, 1, 1], [], []>} : vector<32x72xbf16>, vector<72x128xbf16>, vector<32x128xf32> -> vector<32x128xf32>
    %c0_54 = arith.constant 0 : index
    %c1_55 = arith.constant 1 : index
    %c0_56 = arith.constant 0 : index
    %66 = vector.load %arg12[%c0_54, %c1_55, %c0_56] : memref<2x18x72xf32, #tpu.memory_space<vmem>>, vector<2x16x72xf32>
    %67 = vector.shape_cast %66 : vector<2x16x72xf32> to vector<32x72xf32>
    %68 = arith.truncf %67 : vector<32x72xf32> to vector<32x72xbf16>
    %c1_57 = arith.constant 1 : index
    %c0_58 = arith.constant 0 : index
    %c0_59 = arith.constant 0 : index
    %69 = vector.load %arg2[%c1_57, %c0_58, %c0_59] : memref<3x72x128xbf16, #tpu.memory_space<vmem>>, vector<1x72x128xbf16>
    %70 = vector.shape_cast %69 : vector<1x72x128xbf16> to vector<72x128xbf16>
    %cst_60 = arith.constant dense<0.000000e+00> : vector<32x128xf32>
    %71 = tpu.matmul %68, %70, %cst_60 {dimension_numbers = #tpu.dot_dimension_numbers<[1], [0], [0], [1], [0, 0, 1, 1], [], []>} : vector<32x72xbf16>, vector<72x128xbf16>, vector<32x128xf32> -> vector<32x128xf32>
    %72 = arith.addf %65, %71 : vector<32x128xf32>
    %c0_61 = arith.constant 0 : index
    %c2_62 = arith.constant 2 : index
    %c0_63 = arith.constant 0 : index
    %73 = vector.load %arg12[%c0_61, %c2_62, %c0_63] : memref<2x18x72xf32, #tpu.memory_space<vmem>>, vector<2x16x72xf32>
    %74 = vector.shape_cast %73 : vector<2x16x72xf32> to vector<32x72xf32>
    %75 = arith.truncf %74 : vector<32x72xf32> to vector<32x72xbf16>
    %c2_64 = arith.constant 2 : index
    %c0_65 = arith.constant 0 : index
    %c0_66 = arith.constant 0 : index
    %76 = vector.load %arg2[%c2_64, %c0_65, %c0_66] : memref<3x72x128xbf16, #tpu.memory_space<vmem>>, vector<1x72x128xbf16>
    %77 = vector.shape_cast %76 : vector<1x72x128xbf16> to vector<72x128xbf16>
    %cst_67 = arith.constant dense<0.000000e+00> : vector<32x128xf32>
    %78 = tpu.matmul %75, %77, %cst_67 {dimension_numbers = #tpu.dot_dimension_numbers<[1], [0], [0], [1], [0, 0, 1, 1], [], []>} : vector<32x72xbf16>, vector<72x128xbf16>, vector<32x128xf32> -> vector<32x128xf32>
    %79 = arith.addf %72, %78 : vector<32x128xf32>
    %cst_68 = arith.constant dense<0.000000e+00> : vector<128xf32>
    %80 = vector.multi_reduction <add>, %79, %cst_68 [0] : vector<32x128xf32> to vector<128xf32>
    %81 = vector.shape_cast %80 : vector<128xf32> to vector<1x128xf32>
    %82 = arith.mulf %79, %79 : vector<32x128xf32>
    %cst_69 = arith.constant dense<0.000000e+00> : vector<128xf32>
    %83 = vector.multi_reduction <add>, %82, %cst_69 [0] : vector<32x128xf32> to vector<128xf32>
    %84 = vector.shape_cast %83 : vector<128xf32> to vector<1x128xf32>
    %85 = tpu.concatenate %81, %84 in 0 : vector<1x128xf32>, vector<1x128xf32> -> vector<2x128xf32>
    %c0_70 = arith.constant 0 : index
    %c0_71 = arith.constant 0 : index
    %86 = vector.load %arg9[%c0_70, %c0_71] : memref<128x8xf32, #tpu.memory_space<vmem>>, vector<128x8xf32>
    %cst_72 = arith.constant dense<0.000000e+00> : vector<2x8xf32>
    %87 = tpu.matmul %85, %86, %cst_72 {dimension_numbers = #tpu.dot_dimension_numbers<[1], [0], [0], [1], [0, 0, 1, 1], [], []>} : vector<2x128xf32>, vector<128x8xf32>, vector<2x8xf32> -> vector<2x8xf32>
    %88 = vector.extract_strided_slice %87 {offsets = [0, 0], sizes = [1, 8], strides = [1, 1]} : vector<2x8xf32> to vector<1x8xf32>
    %cst_73 = arith.constant 0.001953125 : f32
    %89 = vector.broadcast %cst_73 : f32 to vector<1x8xf32>
    %90 = arith.mulf %88, %89 : vector<1x8xf32>
    %91 = vector.extract_strided_slice %87 {offsets = [1, 0], sizes = [1, 8], strides = [1, 1]} : vector<2x8xf32> to vector<1x8xf32>
    %cst_74 = arith.constant 0.001953125 : f32
    %92 = vector.broadcast %cst_74 : f32 to vector<1x8xf32>
    %93 = arith.mulf %91, %92 : vector<1x8xf32>
    %94 = arith.mulf %90, %90 : vector<1x8xf32>
    %95 = arith.subf %93, %94 : vector<1x8xf32>
    %c0_75 = arith.constant 0 : index
    %c0_76 = arith.constant 0 : index
    %96 = vector.load %arg5[%c0_75, %c0_76] : memref<1x8xf32, #tpu.memory_space<vmem>>, vector<1x8xf32>
    %cst_77 = arith.constant 9.99999974E-6 : f32
    %97 = vector.broadcast %cst_77 : f32 to vector<1x8xf32>
    %98 = arith.addf %95, %97 : vector<1x8xf32>
    %99 = math.rsqrt %98 : vector<1x8xf32>
    %100 = arith.mulf %96, %99 : vector<1x8xf32>
    %c0_78 = arith.constant 0 : index
    %c0_79 = arith.constant 0 : index
    %101 = vector.load %arg6[%c0_78, %c0_79] : memref<1x8xf32, #tpu.memory_space<vmem>>, vector<1x8xf32>
    %102 = arith.mulf %90, %100 : vector<1x8xf32>
    %103 = arith.subf %101, %102 : vector<1x8xf32>
    %104 = tpu.concatenate %100, %103 in 0 : vector<1x8xf32>, vector<1x8xf32> -> vector<2x8xf32>
    %c0_80 = arith.constant 0 : index
    %c0_81 = arith.constant 0 : index
    %105 = vector.load %arg10[%c0_80, %c0_81] : memref<8x128xf32, #tpu.memory_space<vmem>>, vector<8x128xf32>
    %cst_82 = arith.constant dense<0.000000e+00> : vector<2x128xf32>
    %106 = tpu.matmul %104, %105, %cst_82 {dimension_numbers = #tpu.dot_dimension_numbers<[1], [0], [0], [1], [0, 0, 1, 1], [], []>} : vector<2x8xf32>, vector<8x128xf32>, vector<2x128xf32> -> vector<2x128xf32>
    %107 = vector.extract_strided_slice %106 {offsets = [0, 0], sizes = [1, 128], strides = [1, 1]} : vector<2x128xf32> to vector<1x128xf32>
    %108 = vector.broadcast %107 : vector<1x128xf32> to vector<32x128xf32>
    %109 = arith.mulf %79, %108 : vector<32x128xf32>
    %110 = vector.extract_strided_slice %106 {offsets = [1, 0], sizes = [1, 128], strides = [1, 1]} : vector<2x128xf32> to vector<1x128xf32>
    %111 = vector.broadcast %110 : vector<1x128xf32> to vector<32x128xf32>
    %112 = arith.addf %109, %111 : vector<32x128xf32>
    %cst_83 = arith.constant 0.000000e+00 : f32
    %113 = vector.broadcast %cst_83 : f32 to vector<32x128xf32>
    %114 = arith.maximumf %112, %113 : vector<32x128xf32>
    %115 = vector.shape_cast %114 : vector<32x128xf32> to vector<16x2x128xf32>
    %cst_84 = arith.constant dense<0xFF800000> : vector<16x128xf32>
    %116 = vector.multi_reduction <maximumf>, %115, %cst_84 [1] : vector<16x2x128xf32> to vector<16x128xf32>
    %117 = vector.extract_strided_slice %116 {offsets = [0, 0], sizes = [16, 64], strides = [1, 1]} : vector<16x128xf32> to vector<16x64xf32>
    %118 = vector.extract_strided_slice %116 {offsets = [0, 64], sizes = [16, 64], strides = [1, 1]} : vector<16x128xf32> to vector<16x64xf32>
    %119 = arith.maximumf %117, %118 : vector<16x64xf32>
    %c0_85 = arith.constant 0 : index
    %c0_86 = arith.constant 0 : index
    %120 = vector.load %arg11[%c0_85, %c0_86] : memref<16x64xf32, #tpu.memory_space<vmem>>, vector<16x64xf32>
    tpu.vector_store %arg11[%c0_85, %c0_86], %119 {strides = array<i32>} : memref<16x64xf32, #tpu.memory_space<vmem>>, vector<16x64xf32>,
    return
  }
}

</mosaic_0001>

<llo_original>
// kernel: tpu_custom_call.1
$region0: #{tpu_custom_call.1}
  #allocation0 [shape = 'u32[]', space=smem, size = 0x4, offset = 0x4, fixed_abs, tag = 'smem constant byte address 0x4 - core index']
  #allocation1 [shape = 'u32[144,128]{1,0:T(1,128)}', space=vmem, size = 0x12000, scoped, tag = 'internal scratch']
  #allocation2 [shape = 'f32[2,18,72]{2,1,0:T(8,128)}', space=vmem, size = 0x6000, scoped, tag = 'scratch operand']
  %s0 = inlined_call_operand.vmem [shape: bf16[3,32,72], index: 0, kind: input, shape index: {}]
  %s1 = inlined_call_operand.vmem [shape: bf16[3,72,64], index: 1, kind: input, shape index: {}]
  %s2 = inlined_call_operand.vmem [shape: bf16[3,72,128], index: 2, kind: input, shape index: {}]
  %s3 = inlined_call_operand.vmem [shape: f32[1,4], index: 3, kind: input, shape index: {}]
  %s4 = inlined_call_operand.vmem [shape: f32[1,4], index: 4, kind: input, shape index: {}]
  %s5 = inlined_call_operand.vmem [shape: f32[1,8], index: 5, kind: input, shape index: {}]
  %s6 = inlined_call_operand.vmem [shape: f32[1,8], index: 6, kind: input, shape index: {}]
  %s7 = inlined_call_operand.vmem [shape: f32[64,4], index: 7, kind: input, shape index: {}]
  %s8 = inlined_call_operand.vmem [shape: f32[4,64], index: 8, kind: input, shape index: {}]
  %s9 = inlined_call_operand.vmem [shape: f32[128,8], index: 9, kind: input, shape index: {}]
  %s10 = inlined_call_operand.vmem [shape: f32[8,128], index: 10, kind: input, shape index: {}]
  %s11 = inlined_call_operand.hbm [shape: f32[16,64], index: 11, kind: output, shape index: {}]
  %s12 = sld [smem:[#allocation0]]
  $region54: #{tpu_custom_call.1} parent=0
    _
  %s14 = ssub.s32 1, %s12
  %s15 = scalar_select 0, %s14, %s12
  $region1: #{tpu_custom_call.1} parent=0
    #allocation3 [shape = 'u8[8192]{0}', space=vmem, size = 0x2000, scoped, tag = 'output window, operand 0, single buffered']
    #allocation4 [shape = 's32[1]{0}', space=sflag, size = 0x4, scoped, tag = 'scoped memory for tpu_custom_call.1']
    %16 = vsyncpa [#allocation4], 0
    // Predicated region
    $region2: #{tpu_custom_call.1} parent=1 // pred_check
      _
    $region3: #{tpu_custom_call.1} parent=1 // pred_check_branch
      %18 = sbr.rel (0) target = $region5
    $region4: #{tpu_custom_call.1} parent=1 // pred_region
      _
    $region5: #{tpu_custom_call.1} parent=1 // pred_fallthru
      _
    // Predicated region
    $region6: #{tpu_custom_call.1} parent=1 // pred_check
      _
    $region7: #{tpu_custom_call.1} parent=1 // pred_check_branch
      %20 = sbr.rel (0) target = $region9
    $region8: #{tpu_custom_call.1} parent=1 // pred_region
      _
    $region9: #{tpu_custom_call.1} parent=1 // pred_fallthru
      _
    // Predicated region
    $region10: #{tpu_custom_call.1} parent=1 // pred_check
      _
    $region11: #{tpu_custom_call.1} parent=1 // pred_check_branch
      %22 = sbr.rel (0) target = $region13
    $region12: #{tpu_custom_call.1} parent=1 // pred_region
      _
    $region13: #{tpu_custom_call.1} parent=1 // pred_fallthru
      _
    // Predicated region
    $region14: #{tpu_custom_call.1} parent=1 // pred_check
      _
    $region15: #{tpu_custom_call.1} parent=1 // pred_check_branch
      %24 = sbr.rel (0) target = $region17
    $region16: #{tpu_custom_call.1} parent=1 // pred_region
      _
    $region17: #{tpu_custom_call.1} parent=1 // pred_fallthru
      _
    // Predicated region
    $region18: #{tpu_custom_call.1} parent=1 // pred_check
      _
    $region19: #{tpu_custom_call.1} parent=1 // pred_check_branch
      %26 = sbr.rel (0) target = $region21
    $region20: #{tpu_custom_call.1} parent=1 // pred_region
      _
    $region21: #{tpu_custom_call.1} parent=1 // pred_fallthru
      _
    // Predicated region
    $region22: #{tpu_custom_call.1} parent=1 // pred_check
      _
    $region23: #{tpu_custom_call.1} parent=1 // pred_check_branch
      %28 = sbr.rel (0) target = $region25
    $region24: #{tpu_custom_call.1} parent=1 // pred_region
      _
    $region25: #{tpu_custom_call.1} parent=1 // pred_fallthru
      _
    // Predicated region
    $region26: #{tpu_custom_call.1} parent=1 // pred_check
      _
    $region27: #{tpu_custom_call.1} parent=1 // pred_check_branch
      %30 = sbr.rel (0) target = $region29
    $region28: #{tpu_custom_call.1} parent=1 // pred_region
      _
    $region29: #{tpu_custom_call.1} parent=1 // pred_fallthru
      _
    // Predicated region
    $region30: #{tpu_custom_call.1} parent=1 // pred_check
      _
    $region31: #{tpu_custom_call.1} parent=1 // pred_check_branch
      %32 = sbr.rel (0) target = $region33
    $region32: #{tpu_custom_call.1} parent=1 // pred_region
      _
    $region33: #{tpu_custom_call.1} parent=1 // pred_fallthru
      _
    // Predicated region
    $region34: #{tpu_custom_call.1} parent=1 // pred_check
      _
    $region35: #{tpu_custom_call.1} parent=1 // pred_check_branch
      %34 = sbr.rel (0) target = $region37
    $region36: #{tpu_custom_call.1} parent=1 // pred_region
      _
    $region37: #{tpu_custom_call.1} parent=1 // pred_fallthru
      _
    // Predicated region
    $region38: #{tpu_custom_call.1} parent=1 // pred_check
      _
    $region39: #{tpu_custom_call.1} parent=1 // pred_check_branch
      %36 = sbr.rel (0) target = $region41
    $region40: #{tpu_custom_call.1} parent=1 // pred_region
      _
    $region41: #{tpu_custom_call.1} parent=1 // pred_fallthru
      _
    // Predicated region
    $region42: #{tpu_custom_call.1} parent=1 // pred_check
      _
    $region43: #{tpu_custom_call.1} parent=1 // pred_check_branch
      %38 = sbr.rel (0) target = $region45
    $region44: #{tpu_custom_call.1} parent=1 // pred_region
      _
    $region45: #{tpu_custom_call.1} parent=1 // pred_fallthru
      _
    %v40 = vld [vmem:[%s0] sm:$0xf]
    %v41 = vld [vmem:[%s0 + $0x4] sm:$0xf]
    %v42 = vld [vmem:[%s0 + $0x8] sm:$0xf]
    %v43 = vld [vmem:[%s0 + $0xc] sm:$0xf]
    %v44 = vld [vmem:[%s1] sm:$0xf]
    %v45 = vld [vmem:[%s1 + $0x4] sm:$0xf]
    %v46 = vld [vmem:[%s1 + $0x8] sm:$0xf]
    %v47 = vld [vmem:[%s1 + $0xc] sm:$0xf]
    %v48 = vld [vmem:[%s1 + $0x10] sm:$0xf]
    %v49 = vld [vmem:[%s1 + $0x14] sm:$0xf]
    %v50 = vld [vmem:[%s1 + $0x18] sm:$0xf]
    %v51 = vld [vmem:[%s1 + $0x1c] sm:$0xf]
    %v52 = vld [vmem:[%s1 + $0x20] sm:$0xf]
    %s53 = scalar_lea.vmem %s0, 16
    %v54 = vld [vmem:[%s53] sm:$0xf]
    %v55 = vld [vmem:[%s53 + $0x4] sm:$0xf]
    %v56 = vld [vmem:[%s53 + $0x8] sm:$0xf]
    %v57 = vld [vmem:[%s53 + $0xc] sm:$0xf]
    %s58 = scalar_lea.vmem %s1, 36
    %v59 = vld [vmem:[%s58] sm:$0xf]
    %v60 = vld [vmem:[%s58 + $0x4] sm:$0xf]
    %v61 = vld [vmem:[%s58 + $0x8] sm:$0xf]
    %v62 = vld [vmem:[%s58 + $0xc] sm:$0xf]
    %v63 = vld [vmem:[%s58 + $0x10] sm:$0xf]
    %v64 = vld [vmem:[%s58 + $0x14] sm:$0xf]
    %v65 = vld [vmem:[%s58 + $0x18] sm:$0xf]
    %v66 = vld [vmem:[%s58 + $0x1c] sm:$0xf]
    %v67 = vld [vmem:[%s58 + $0x20] sm:$0xf]
    %v72 = vunpack.c.l.b16 %v54
    %v73 = vunpack.c.l.b16 %v55
    %v74 = vunpack.c.l.b16 %v56
    %v75 = vunpack.c.l.b16 %v57
    %v76 = vpack.c.b16 %v73, %v72
    %v77 = vpack.c.b16 %v75, %v74
    %v87 = vunpack.c.l.b16 %v59
    %v88 = vunpack.c.l.b16 %v60
    %v89 = vunpack.c.l.b16 %v61
    %v90 = vunpack.c.l.b16 %v62
    %v91 = vunpack.c.l.b16 %v63
    %v92 = vunpack.c.l.b16 %v64
    %v93 = vunpack.c.l.b16 %v65
    %v94 = vunpack.c.l.b16 %v66
    %v95 = vunpack.c.l.b16 %v67
    %v96 = vpack.c.b16 %v88, %v87
    %v97 = vpack.c.b16 %v90, %v89
    %v98 = vpack.c.b16 %v92, %v91
    %v99 = vpack.c.b16 %v94, %v93
    %v100 = vpack.c.b16 %v95, %v95
    %vm105 = vcmask 588800
    %v107 = vsel %vm105, %v76, 0
    %v110 = vsel %vm105, %v77, 0
    %vm112 = vcmask 1043456
    %v114 = vsel %vm112, %v100, 0
    %116 = vmatprep.subr.bf16.mxu0 0
    %117 = vmatpush1.bf16.msra.mxu0 %v96
    %118 = vmatprep.subr.bf16.mxu0 0
    %119 = vmatpush1.bf16.msra.mxu0 %v97
    %120 = vmatprep.subr.bf16.mxu0 0
    %121 = vmatpush1.bf16.msra.mxu0 %v98
    %122 = vmatprep.subr.bf16.mxu0 0
    %123 = vmatpush1.bf16.msra.mxu0 %v99
    %124 = vmatprep.subr.bf16.mxu0 0
    %125 = vmatpush1.bf16.msra.mxu0 %v114
    %126 = vmatprep.subr.bf16.mxu0 0
    %127 = vmatpush1.bf16.msra.mxu0 0
    %128 = vmatprep.subr.bf16.mxu0 0
    %129 = vmatpush1.bf16.msra.mxu0 0
    %130 = vmatprep.subr.bf16.mxu0 0
    %131 = vmatpush1.bf16.msra.mxu0 0
    %132 = vmatprep.subr.bf16.mxu0 0
    %133 = vmatpush1.bf16.msra.mxu0 0
    %134 = vmatprep.subr.bf16.mxu0 0
    %135 = vmatpush1.bf16.msra.mxu0 0
    %136 = vmatprep.subr.bf16.mxu0 0
    %137 = vmatpush1.bf16.msra.mxu0 0
    %138 = vmatprep.subr.bf16.mxu0 0
    %139 = vmatpush1.bf16.msra.mxu0 0
    %140 = vmatprep.subr.bf16.mxu0 0
    %141 = vmatpush1.bf16.msra.mxu0 0
    %142 = vmatprep.subr.bf16.mxu0 0
    %143 = vmatpush1.bf16.msra.mxu0 0
    %144 = vmatprep.subr.bf16.mxu0 0
    %145 = vmatpush1.bf16.msra.mxu0 0
    %146 = vmatprep.subr.bf16.mxu0 0
    %147 = vmatpush1.bf16.msra.mxu0 0
    %148 = vmatprep.mubr.bf16.mxu0 0
    %149 = vmatmul.mubr.bf16.gmra.mrb[0].mxu0 %v107
    %v150 = vpop.f32.mrb[0].mxu0
    %v151 = vadd.f32 0.0, %v150
    %v152 = vpop.f32.mrb[0].mxu0
    %v153 = vpop.f32.mrb[0].mxu0
    %v154 = vadd.f32 0.0, %v153
    %v155 = vpop.f32.mrb[0].mxu0
    %156 = vmatprep.mubr.bf16.mxu0 0
    %157 = vmatmul.mubr.bf16.gmra.mrb[0].mxu0 %v110
    %v158 = vpop.f32.mrb[0].mxu0
    %v159 = vadd.f32 0.0, %v158
    %v160 = vpop.f32.mrb[0].mxu0
    %v161 = vpop.f32.mrb[0].mxu0
    %v162 = vadd.f32 0.0, %v161
    %v163 = vpop.f32.mrb[0].mxu0
    %164 = vdwg.mxu0
    %v169 = vunpack.c.l.b16 %v40
    %v170 = vunpack.c.l.b16 %v41
    %v171 = vunpack.c.l.b16 %v42
    %v172 = vunpack.c.l.b16 %v43
    %v173 = vpack.c.b16 %v170, %v169
    %v174 = vpack.c.b16 %v172, %v171
    %v184 = vunpack.c.l.b16 %v44
    %v185 = vunpack.c.l.b16 %v45
    %v186 = vunpack.c.l.b16 %v46
    %v187 = vunpack.c.l.b16 %v47
    %v188 = vunpack.c.l.b16 %v48
    %v189 = vunpack.c.l.b16 %v49
    %v190 = vunpack.c.l.b16 %v50
    %v191 = vunpack.c.l.b16 %v51
    %v192 = vunpack.c.l.b16 %v52
    %v193 = vpack.c.b16 %v185, %v184
    %v194 = vpack.c.b16 %v187, %v186
    %v195 = vpack.c.b16 %v189, %v188
    %v196 = vpack.c.b16 %v191, %v190
    %v197 = vpack.c.b16 %v192, %v192
    %v203 = vsel %vm105, %v173, 0
    %v206 = vsel %vm105, %v174, 0
    %v209 = vsel %vm112, %v197, 0
    %211 = vmatprep.subr.bf16.mxu0 0
    %212 = vmatpush1.bf16.msra.mxu0 %v193
    %213 = vmatprep.subr.bf16.mxu0 0
    %214 = vmatpush1.bf16.msra.mxu0 %v194
    %215 = vmatprep.subr.bf16.mxu0 0
    %216 = vmatpush1.bf16.msra.mxu0 %v195
    %217 = vmatprep.subr.bf16.mxu0 0
    %218 = vmatpush1.bf16.msra.mxu0 %v196
    %219 = vmatprep.subr.bf16.mxu0 0
    %220 = vmatpush1.bf16.msra.mxu0 %v209
    %221 = vmatprep.subr.bf16.mxu0 0
    %222 = vmatpush1.bf16.msra.mxu0 0
    %223 = vmatprep.subr.bf16.mxu0 0
    %224 = vmatpush1.bf16.msra.mxu0 0
    %225 = vmatprep.subr.bf16.mxu0 0
    %226 = vmatpush1.bf16.msra.mxu0 0
    %227 = vmatprep.subr.bf16.mxu0 0
    %228 = vmatpush1.bf16.msra.mxu0 0
    %229 = vmatprep.subr.bf16.mxu0 0
    %230 = vmatpush1.bf16.msra.mxu0 0
    %231 = vmatprep.subr.bf16.mxu0 0
    %232 = vmatpush1.bf16.msra.mxu0 0
    %233 = vmatprep.subr.bf16.mxu0 0
    %234 = vmatpush1.bf16.msra.mxu0 0
    %235 = vmatprep.subr.bf16.mxu0 0
    %236 = vmatpush1.bf16.msra.mxu0 0
    %237 = vmatprep.subr.bf16.mxu0 0
    %238 = vmatpush1.bf16.msra.mxu0 0
    %239 = vmatprep.subr.bf16.mxu0 0
    %240 = vmatpush1.bf16.msra.mxu0 0
    %241 = vmatprep.subr.bf16.mxu0 0
    %242 = vmatpush1.bf16.msra.mxu0 0
    %243 = vmatprep.mubr.bf16.mxu0 0
    %244 = vmatmul.mubr.bf16.gmra.mrb[0].mxu0 %v203
    %v245 = vpop.f32.mrb[0].mxu0
    %v246 = vadd.f32 %v151, %v245
    %v247 = vpop.f32.mrb[0].mxu0
    %v248 = vpop.f32.mrb[0].mxu0
    %v249 = vadd.f32 %v154, %v248
    %v250 = vpop.f32.mrb[0].mxu0
    %251 = vmatprep.mubr.bf16.mxu0 0
    %252 = vmatmul.mubr.bf16.gmra.mrb[0].mxu0 %v206
    %v253 = vpop.f32.mrb[0].mxu0
    %v254 = vadd.f32 %v159, %v253
    %v255 = vpop.f32.mrb[0].mxu0
    %v256 = vpop.f32.mrb[0].mxu0
    %v257 = vadd.f32 %v162, %v256
    %v258 = vpop.f32.mrb[0].mxu0
    %259 = vdwg.mxu0
    %s260 = scalar_lea.vmem %s0, 32
    %v261 = vld [vmem:[%s260] sm:$0xf]
    %v262 = vld [vmem:[%s260 + $0x4] sm:$0xf]
    %v263 = vld [vmem:[%s260 + $0x8] sm:$0xf]
    %v264 = vld [vmem:[%s260 + $0xc] sm:$0xf]
    %s265 = scalar_lea.vmem %s1, 72
    %v266 = vld [vmem:[%s265] sm:$0xf]
    %v267 = vld [vmem:[%s265 + $0x4] sm:$0xf]
    %v268 = vld [vmem:[%s265 + $0x8] sm:$0xf]
    %v269 = vld [vmem:[%s265 + $0xc] sm:$0xf]
    %v270 = vld [vmem:[%s265 + $0x10] sm:$0xf]
    %v271 = vld [vmem:[%s265 + $0x14] sm:$0xf]
    %v272 = vld [vmem:[%s265 + $0x18] sm:$0xf]
    %v273 = vld [vmem:[%s265 + $0x1c] sm:$0xf]
    %v274 = vld [vmem:[%s265 + $0x20] sm:$0xf]
    %v279 = vunpack.c.l.b16 %v261
    %v280 = vunpack.c.l.b16 %v262
    %v281 = vunpack.c.l.b16 %v263
    %v282 = vunpack.c.l.b16 %v264
    %v283 = vpack.c.b16 %v280, %v279
    %v284 = vpack.c.b16 %v282, %v281
    %v294 = vunpack.c.l.b16 %v266
    %v295 = vunpack.c.l.b16 %v267
    %v296 = vunpack.c.l.b16 %v268
    %v297 = vunpack.c.l.b16 %v269
    %v298 = vunpack.c.l.b16 %v270
    %v299 = vunpack.c.l.b16 %v271
    %v300 = vunpack.c.l.b16 %v272
    %v301 = vunpack.c.l.b16 %v273
    %v302 = vunpack.c.l.b16 %v274
    %v303 = vpack.c.b16 %v295, %v294
    %v304 = vpack.c.b16 %v297, %v296
    %v305 = vpack.c.b16 %v299, %v298
    %v306 = vpack.c.b16 %v301, %v300
    %v307 = vpack.c.b16 %v302, %v302
    %v313 = vsel %vm105, %v283, 0
    %v316 = vsel %vm105, %v284, 0
    %v319 = vsel %vm112, %v307, 0
    %321 = vmatprep.subr.bf16.mxu0 0
    %322 = vmatpush1.bf16.msra.mxu0 %v303
    %323 = vmatprep.subr.bf16.mxu0 0
    %324 = vmatpush1.bf16.msra.mxu0 %v304
    %325 = vmatprep.subr.bf16.mxu0 0
    %326 = vmatpush1.bf16.msra.mxu0 %v305
    %327 = vmatprep.subr.bf16.mxu0 0
    %328 = vmatpush1.bf16.msra.mxu0 %v306
    %329 = vmatprep.subr.bf16.mxu0 0
    %330 = vmatpush1.bf16.msra.mxu0 %v319
    %331 = vmatprep.subr.bf16.mxu0 0
    %332 = vmatpush1.bf16.msra.mxu0 0
    %333 = vmatprep.subr.bf16.mxu0 0
    %334 = vmatpush1.bf16.msra.mxu0 0
    %335 = vmatprep.subr.bf16.mxu0 0
    %336 = vmatpush1.bf16.msra.mxu0 0
    %337 = vmatprep.subr.bf16.mxu0 0
    %338 = vmatpush1.bf16.msra.mxu0 0
    %339 = vmatprep.subr.bf16.mxu0 0
    %340 = vmatpush1.bf16.msra.mxu0 0
    %341 = vmatprep.subr.bf16.mxu0 0
    %342 = vmatpush1.bf16.msra.mxu0 0
    %343 = vmatprep.subr.bf16.mxu0 0
    %344 = vmatpush1.bf16.msra.mxu0 0
    %345 = vmatprep.subr.bf16.mxu0 0
    %346 = vmatpush1.bf16.msra.mxu0 0
    %347 = vmatprep.subr.bf16.mxu0 0
    %348 = vmatpush1.bf16.msra.mxu0 0
    %349 = vmatprep.subr.bf16.mxu0 0
    %350 = vmatpush1.bf16.msra.mxu0 0
    %351 = vmatprep.subr.bf16.mxu0 0
    %352 = vmatpush1.bf16.msra.mxu0 0
    %353 = vmatprep.mubr.bf16.mxu0 0
    %354 = vmatmul.mubr.bf16.gmra.mrb[0].mxu0 %v313
    %v355 = vpop.f32.mrb[0].mxu0
    %v356 = vadd.f32 0.0, %v355
    %v357 = vpop.f32.mrb[0].mxu0
    %v358 = vpop.f32.mrb[0].mxu0
    %v359 = vadd.f32 0.0, %v358
    %v360 = vpop.f32.mrb[0].mxu0
    %361 = vmatprep.mubr.bf16.mxu0 0
    %362 = vmatmul.mubr.bf16.gmra.mrb[0].mxu0 %v316
    %v363 = vpop.f32.mrb[0].mxu0
    %v364 = vadd.f32 0.0, %v363
    %v365 = vpop.f32.mrb[0].mxu0
    %v366 = vpop.f32.mrb[0].mxu0
    %v367 = vadd.f32 0.0, %v366
    %v368 = vpop.f32.mrb[0].mxu0
    %369 = vdwg.mxu0
    %v370 = vadd.f32 %v246, %v356
    %v371 = vadd.f32 %v249, %v359
    %v372 = vadd.f32 %v254, %v364
    %v373 = vadd.f32 %v257, %v367
    %vm374 = vcmask 523264
    %v375 = vsel %vm374, %v370, 0.0
    %v376 = vsel %vm374, %v371, 0.0
    %v377 = vadd.f32 %v375, %v376
    %v378 = vsel %vm374, %v372, 0.0
    %v379 = vadd.f32 %v377, %v378
    %v380 = vsel %vm374, %v373, 0.0
    %v381 = vadd.f32 %v379, %v380
    %v382 = vrot.slane %v381, 4
    %v383 = vadd.f32 %v381, %v382
    %v384 = vrot.slane %v383, 2
    %v385 = vadd.f32 %v383, %v384
    %v386 = vrot.slane %v385, 1
    %v387 = vadd.f32 %v385, %v386
    %v388 = vmul.f32 %v370, %v370
    %v389 = vmul.f32 %v371, %v371
    %v390 = vmul.f32 %v372, %v372
    %v391 = vmul.f32 %v373, %v373
    %v392 = vsel %vm374, %v388, 0.0
    %v393 = vsel %vm374, %v389, 0.0
    %v394 = vadd.f32 %v392, %v393
    %v395 = vsel %vm374, %v390, 0.0
    %v396 = vadd.f32 %v394, %v395
    %v397 = vsel %vm374, %v391, 0.0
    %v398 = vadd.f32 %v396, %v397
    %v399 = vrot.slane %v398, 4
    %v400 = vadd.f32 %v398, %v399
    %v401 = vrot.slane %v400, 2
    %v402 = vadd.f32 %v400, %v401
    %v403 = vrot.slane %v402, 1
    %v404 = vadd.f32 %v402, %v403
    %vm405 = vcmask 1040384
    %v406 = vsel %vm405, %v387, %v404
    %v407 = vld [vmem:[%s7] sm:$0xff]
    %v408 = vld [vmem:[%s7 + $0x8] sm:$0xff]
    %v409 = vld [vmem:[%s7 + $0x10] sm:$0xff]
    %v410 = vld [vmem:[%s7 + $0x18] sm:$0xff]
    %v411 = vld [vmem:[%s7 + $0x20] sm:$0xff]
    %v412 = vld [vmem:[%s7 + $0x28] sm:$0xff]
    %v413 = vld [vmem:[%s7 + $0x30] sm:$0xff]
    %v414 = vld [vmem:[%s7 + $0x38] sm:$0xff]
    %v416 = vsel %vm374, %v406, 0
    %418 = vmatprep.subr.mxu0 0.0
    %419 = vmatpush1.msra.mxu0 %v407
    %420 = vmatprep.subr.mxu0 0.0
    %421 = vmatpush1.msra.mxu0 %v408
    %422 = vmatprep.subr.mxu0 0.0
    %423 = vmatpush1.msra.mxu0 %v409
    %424 = vmatprep.subr.mxu0 0.0
    %425 = vmatpush1.msra.mxu0 %v410
    %426 = vmatprep.subr.mxu0 0.0
    %427 = vmatpush1.msra.mxu0 %v411
    %428 = vmatprep.subr.mxu0 0.0
    %429 = vmatpush1.msra.mxu0 %v412
    %430 = vmatprep.subr.mxu0 0.0
    %431 = vmatpush1.msra.mxu0 %v413
    %432 = vmatprep.subr.mxu0 0.0
    %433 = vmatpush1.msra.mxu0 %v414
    %434 = vmatprep.subr.mxu0 0.0
    %435 = vmatpush1.msra.mxu0 0.0
    %436 = vmatprep.subr.mxu0 0.0
    %437 = vmatpush1.msra.mxu0 0.0
    %438 = vmatprep.subr.mxu0 0.0
    %439 = vmatpush1.msra.mxu0 0.0
    %440 = vmatprep.subr.mxu0 0.0
    %441 = vmatpush1.msra.mxu0 0.0
    %442 = vmatprep.subr.mxu0 0.0
    %443 = vmatpush1.msra.mxu0 0.0
    %444 = vmatprep.subr.mxu0 0.0
    %445 = vmatpush1.msra.mxu0 0.0
    %446 = vmatprep.subr.mxu0 0.0
    %447 = vmatpush1.msra.mxu0 0.0
    %448 = vmatprep.subr.mxu0 0.0
    %449 = vmatpush1.msra.mxu0 0.0
    %450 = vmatprep.subr.mxu0 0.0
    %451 = vmatpush1.msra.mxu0 0.0
    %452 = vmatprep.subr.mxu0 0.0
    %453 = vmatpush1.msra.mxu0 0.0
    %454 = vmatprep.subr.mxu0 0.0
    %455 = vmatpush1.msra.mxu0 0.0
    %456 = vmatprep.subr.mxu0 0.0
    %457 = vmatpush1.msra.mxu0 0.0
    %458 = vmatprep.subr.mxu0 0.0
    %459 = vmatpush1.msra.mxu0 0.0
    %460 = vmatprep.subr.mxu0 0.0
    %461 = vmatpush1.msra.mxu0 0.0
    %462 = vmatprep.subr.mxu0 0.0
    %463 = vmatpush1.msra.mxu0 0.0
    %464 = vmatprep.subr.mxu0 0.0
    %465 = vmatpush1.msra.mxu0 0.0
    %466 = vmatprep.subr.mxu0 0.0
    %467 = vmatpush1.msra.mxu0 0.0
    %468 = vmatprep.subr.mxu0 0.0
    %469 = vmatpush1.msra.mxu0 0.0
    %470 = vmatprep.subr.mxu0 0.0
    %471 = vmatpush1.msra.mxu0 0.0
    %472 = vmatprep.subr.mxu0 0.0
    %473 = vmatpush1.msra.mxu0 0.0
    %474 = vmatprep.subr.mxu0 0.0
    %475 = vmatpush1.msra.mxu0 0.0
    %476 = vmatprep.subr.mxu0 0.0
    %477 = vmatpush1.msra.mxu0 0.0
    %478 = vmatprep.subr.mxu0 0.0
    %479 = vmatpush1.msra.mxu0 0.0
    %480 = vmatprep.subr.mxu0 0.0
    %481 = vmatpush1.msra.mxu0 0.0
    %482 = vmatprep.mubr.f32.mxu0 0.0
    %483 = vmatmul.mubr.f32.gmra.mrb[0].mxu0 %v416
    %v484 = vpop.f32.mrb[0].mxu0
    %v485 = vadd.f32 0.0, %v484
    %v486 = vpop.f32.mrb[0].mxu0
    %487 = vdwg.mxu0
    %v488 = vmul.f32 %v485, 0.001953125
    %v489 = vmul.f32 %v488, %v488
    %v491 = vrot.slane %v489, 7
    %v493 = vsub.f32 %v488, %v491
    %v494 = vld [vmem:[%s3] sm:$0x1]
    %v495 = vadd.f32 %v493, 1e-05
    %v496 = vrsqrt.pop %v495
    %v499 = vunpack.c.l.s4 1966171168
    %v500 = vunpack.c.0.s8 %v499
    %v501 = vlaneseq
    %v502 = vshrl.u32 %v501, 7
    %v503 = vsub.s32 %v500, %v502
    %v504 = vrot.slane %v496, %v503
    %v505 = vcombine.high %v504, %v504
    %v507 = vunpack.c.l.s4 1966171168
    %v508 = vunpack.c.0.s8 %v507
    %v509 = vlaneseq
    %v510 = vshrl.u32 %v509, 7
    %v511 = vsub.s32 %v508, %v510
    %v512 = vrot.slane %v505, %v511
    %v514 = vmul.f32 %v494, %v512
    %v515 = vld [vmem:[%s4] sm:$0x1]
    %v516 = vmul.f32 %v488, %v514
    %v517 = vsub.f32 %v515, %v516
    %v519 = vlaneseq
    %v520 = vshrl.u32 %v519, 7
    %v521 = vsub.s32 0, %v520
    %v522 = vrot.slane %v517, %v521
    %v524 = vsel %vm405, %v514, %v522
    %v525 = vld [vmem:[%s8] sm:$0xf]
    %vm526 = vcmask 31744
    %v528 = vsel %vm526, %v524, 0
    %v531 = vsel %vm112, %v525, 0
    %533 = vmatprep.subr.mxu0 0.0
    %534 = vmatpush1.msra.mxu0 %v531
    %535 = vmatprep.subr.mxu0 0.0
    %536 = vmatpush1.msra.mxu0 0.0
    %537 = vmatprep.subr.mxu0 0.0
    %538 = vmatpush1.msra.mxu0 0.0
    %539 = vmatprep.subr.mxu0 0.0
    %540 = vmatpush1.msra.mxu0 0.0
    %541 = vmatprep.subr.mxu0 0.0
    %542 = vmatpush1.msra.mxu0 0.0
    %543 = vmatprep.subr.mxu0 0.0
    %544 = vmatpush1.msra.mxu0 0.0
    %545 = vmatprep.subr.mxu0 0.0
    %546 = vmatpush1.msra.mxu0 0.0
    %547 = vmatprep.subr.mxu0 0.0
    %548 = vmatpush1.msra.mxu0 0.0
    %549 = vmatprep.subr.mxu0 0.0
    %550 = vmatpush1.msra.mxu0 0.0
    %551 = vmatprep.subr.mxu0 0.0
    %552 = vmatpush1.msra.mxu0 0.0
    %553 = vmatprep.subr.mxu0 0.0
    %554 = vmatpush1.msra.mxu0 0.0
    %555 = vmatprep.subr.mxu0 0.0
    %556 = vmatpush1.msra.mxu0 0.0
    %557 = vmatprep.subr.mxu0 0.0
    %558 = vmatpush1.msra.mxu0 0.0
    %559 = vmatprep.subr.mxu0 0.0
    %560 = vmatpush1.msra.mxu0 0.0
    %561 = vmatprep.subr.mxu0 0.0
    %562 = vmatpush1.msra.mxu0 0.0
    %563 = vmatprep.subr.mxu0 0.0
    %564 = vmatpush1.msra.mxu0 0.0
    %565 = vmatprep.subr.mxu0 0.0
    %566 = vmatpush1.msra.mxu0 0.0
    %567 = vmatprep.subr.mxu0 0.0
    %568 = vmatpush1.msra.mxu0 0.0
    %569 = vmatprep.subr.mxu0 0.0
    %570 = vmatpush1.msra.mxu0 0.0
    %571 = vmatprep.subr.mxu0 0.0
    %572 = vmatpush1.msra.mxu0 0.0
    %573 = vmatprep.subr.mxu0 0.0
    %574 = vmatpush1.msra.mxu0 0.0
    %575 = vmatprep.subr.mxu0 0.0
    %576 = vmatpush1.msra.mxu0 0.0
    %577 = vmatprep.subr.mxu0 0.0
    %578 = vmatpush1.msra.mxu0 0.0
    %579 = vmatprep.subr.mxu0 0.0
    %580 = vmatpush1.msra.mxu0 0.0
    %581 = vmatprep.subr.mxu0 0.0
    %582 = vmatpush1.msra.mxu0 0.0
    %583 = vmatprep.subr.mxu0 0.0
    %584 = vmatpush1.msra.mxu0 0.0
    %585 = vmatprep.subr.mxu0 0.0
    %586 = vmatpush1.msra.mxu0 0.0
    %587 = vmatprep.subr.mxu0 0.0
    %588 = vmatpush1.msra.mxu0 0.0
    %589 = vmatprep.subr.mxu0 0.0
    %590 = vmatpush1.msra.mxu0 0.0
    %591 = vmatprep.subr.mxu0 0.0
    %592 = vmatpush1.msra.mxu0 0.0
    %593 = vmatprep.subr.mxu0 0.0
    %594 = vmatpush1.msra.mxu0 0.0
    %595 = vmatprep.subr.mxu0 0.0
    %596 = vmatpush1.msra.mxu0 0.0
    %597 = vmatprep.mubr.f32.mxu0 0.0
    %598 = vmatmul.mubr.f32.gmra.mrb[0].mxu0 %v528
    %v599 = vpop.f32.mrb[0].mxu0
    %v600 = vadd.f32 0.0, %v599
    %v601 = vpop.f32.mrb[0].mxu0
    %602 = vdwg.mxu0
    %v603 = vlaneseq
    %v604 = vshrl.u32 %v603, 7
    %v605 = vsub.s32 0, %v604
    %v606 = vrot.slane %v600, %v605
    %v607 = vmul.f32 %v370, %v606
    %v608 = vmul.f32 %v371, %v606
    %v609 = vmul.f32 %v372, %v606
    %v610 = vmul.f32 %v373, %v606
    %v611 = vlaneseq
    %v612 = vshrl.u32 %v611, 7
    %v613 = vsub.s32 1, %v612
    %v614 = vrot.slane %v600, %v613
    %v615 = vadd.f32 %v607, %v614
    %v616 = vadd.f32 %v608, %v614
    %v617 = vadd.f32 %v609, %v614
    %v618 = vadd.f32 %v610, %v614
    %v619 = vmax.f32 %v615, 0.0
    %v620 = vmax.f32 %v616, 0.0
    %v621 = vmax.f32 %v617, 0.0
    %v622 = vmax.f32 %v618, 0.0
    %vm623 = vcmask 581632
    %624 = vst.msk [vmem:[#allocation2] sm:$0x1] %vm623, 0.0
    %625 = vst.msk [vmem:[#allocation2 + $0x18] sm:$0x1] %vm623, 0.0
    %626 = vst.msk [vmem:[#allocation2 + $0x11] sm:$0x1] %vm623, 0.0
    %627 = vst.msk [vmem:[#allocation2 + $0x29] sm:$0x1] %vm623, 0.0
    %628 = vst.msk [vmem:[#allocation2 + $0x1] sm:$0xff] %vm526, 0.0
    %629 = vst.msk [vmem:[#allocation2 + $0x9] sm:$0xff] %vm526, 0.0
    %630 = vst.msk [vmem:[#allocation2 + $0x19] sm:$0xff] %vm526, 0.0
    %631 = vst.msk [vmem:[#allocation2 + $0x21] sm:$0xff] %vm526, 0.0
    %vm632 = vcmask 589344
    %633 = vst.msk [vmem:[#allocation2 + $0x1] sm:$0xff] %vm632, 0.0
    %634 = vst.msk [vmem:[#allocation2 + $0x9] sm:$0xff] %vm632, 0.0
    %635 = vst.msk [vmem:[#allocation2 + $0x19] sm:$0xff] %vm632, 0.0
    %636 = vst.msk [vmem:[#allocation2 + $0x21] sm:$0xff] %vm632, 0.0
    %641 = vrot.lane.b32.xlu0 %v619, 4
    %v642 = vpop.permute.xlu0 %641
    %643 = vrot.lane.b32.xlu0 %v620, 4
    %v644 = vpop.permute.xlu0 %643
    %645 = vrot.lane.b32.xlu0 %v621, 4
    %v646 = vpop.permute.xlu0 %645
    %647 = vrot.lane.b32.xlu0 %v622, 4
    %v648 = vpop.permute.xlu0 %647
    %vm653 = vcmask 556064
    %654 = vst.msk [vmem:[#allocation2 + $0x1] sm:$0xff] %vm653, %v642
    %655 = vst.msk [vmem:[#allocation2 + $0x9] sm:$0xff] %vm653, %v644
    %656 = vst.msk [vmem:[#allocation2 + $0x19] sm:$0xff] %vm653, %v646
    %657 = vst.msk [vmem:[#allocation2 + $0x21] sm:$0xff] %vm653, %v648
    %v658 = vld [vmem:[#allocation2] sm:$0xff]
    %v659 = vld [vmem:[#allocation2 + $0x8] sm:$0xff]
    %v660 = vld [vmem:[#allocation2 + $0x18] sm:$0xff]
    %v661 = vld [vmem:[#allocation2 + $0x20] sm:$0xff]
    %v662 = vpack.c.bf16 %v659, %v658
    %v663 = vpack.c.bf16 %v661, %v660
    %v664 = vld [vmem:[%s2] sm:$0xf]
    %v665 = vld [vmem:[%s2 + $0x4] sm:$0xf]
    %v666 = vld [vmem:[%s2 + $0x8] sm:$0xf]
    %v667 = vld [vmem:[%s2 + $0xc] sm:$0xf]
    %v668 = vld [vmem:[%s2 + $0x10] sm:$0xf]
    %v669 = vld [vmem:[%s2 + $0x14] sm:$0xf]
    %v670 = vld [vmem:[%s2 + $0x18] sm:$0xf]
    %v671 = vld [vmem:[%s2 + $0x1c] sm:$0xf]
    %v672 = vld [vmem:[%s2 + $0x20] sm:$0xf]
    %v673 = vld [vmem:[#allocation2 + $0x1] sm:$0xff]
    %v674 = vld [vmem:[#allocation2 + $0x9] sm:$0xff]
    %v675 = vld [vmem:[#allocation2 + $0x19] sm:$0xff]
    %v676 = vld [vmem:[#allocation2 + $0x21] sm:$0xff]
    %v677 = vpack.c.bf16 %v674, %v673
    %v678 = vpack.c.bf16 %v676, %v675
    %s679 = scalar_lea.vmem %s2, 36
    %v680 = vld [vmem:[%s679] sm:$0xf]
    %v681 = vld [vmem:[%s679 + $0x4] sm:$0xf]
    %v682 = vld [vmem:[%s679 + $0x8] sm:$0xf]
    %v683 = vld [vmem:[%s679 + $0xc] sm:$0xf]
    %v684 = vld [vmem:[%s679 + $0x10] sm:$0xf]
    %v685 = vld [vmem:[%s679 + $0x14] sm:$0xf]
    %v686 = vld [vmem:[%s679 + $0x18] sm:$0xf]
    %v687 = vld [vmem:[%s679 + $0x1c] sm:$0xf]
    %v688 = vld [vmem:[%s679 + $0x20] sm:$0xf]
    %v698 = vunpack.c.l.b16 %v680
    %v699 = vunpack.c.l.b16 %v681
    %v700 = vunpack.c.l.b16 %v682
    %v701 = vunpack.c.l.b16 %v683
    %v702 = vunpack.c.l.b16 %v684
    %v703 = vunpack.c.l.b16 %v685
    %v704 = vunpack.c.l.b16 %v686
    %v705 = vunpack.c.l.b16 %v687
    %v706 = vunpack.c.l.b16 %v688
    %v707 = vpack.c.b16 %v699, %v698
    %v708 = vpack.c.b16 %v701, %v700
    %v709 = vpack.c.b16 %v703, %v702
    %v710 = vpack.c.b16 %v705, %v704
    %v711 = vpack.c.b16 %v706, %v706
    %v717 = vsel %vm105, %v677, 0
    %v720 = vsel %vm105, %v678, 0
    %v723 = vsel %vm112, %v711, 0
    %725 = vmatprep.subr.bf16.mxu0 0
    %726 = vmatpush1.bf16.msra.mxu0 %v707
    %727 = vmatprep.subr.bf16.mxu0 0
    %728 = vmatpush1.bf16.msra.mxu0 %v708
    %729 = vmatprep.subr.bf16.mxu0 0
    %730 = vmatpush1.bf16.msra.mxu0 %v709
    %731 = vmatprep.subr.bf16.mxu0 0
    %732 = vmatpush1.bf16.msra.mxu0 %v710
    %733 = vmatprep.subr.bf16.mxu0 0
    %734 = vmatpush1.bf16.msra.mxu0 %v723
    %735 = vmatprep.subr.bf16.mxu0 0
    %736 = vmatpush1.bf16.msra.mxu0 0
    %737 = vmatprep.subr.bf16.mxu0 0
    %738 = vmatpush1.bf16.msra.mxu0 0
    %739 = vmatprep.subr.bf16.mxu0 0
    %740 = vmatpush1.bf16.msra.mxu0 0
    %741 = vmatprep.subr.bf16.mxu0 0
    %742 = vmatpush1.bf16.msra.mxu0 0
    %743 = vmatprep.subr.bf16.mxu0 0
    %744 = vmatpush1.bf16.msra.mxu0 0
    %745 = vmatprep.subr.bf16.mxu0 0
    %746 = vmatpush1.bf16.msra.mxu0 0
    %747 = vmatprep.subr.bf16.mxu0 0
    %748 = vmatpush1.bf16.msra.mxu0 0
    %749 = vmatprep.subr.bf16.mxu0 0
    %750 = vmatpush1.bf16.msra.mxu0 0
    %751 = vmatprep.subr.bf16.mxu0 0
    %752 = vmatpush1.bf16.msra.mxu0 0
    %753 = vmatprep.subr.bf16.mxu0 0
    %754 = vmatpush1.bf16.msra.mxu0 0
    %755 = vmatprep.subr.bf16.mxu0 0
    %756 = vmatpush1.bf16.msra.mxu0 0
    %757 = vmatprep.mubr.bf16.mxu0 0
    %758 = vmatmul.mubr.bf16.gmra.mrb[0].mxu0 %v717
    %v759 = vpop.f32.mrb[0].mxu0
    %v760 = vadd.f32 0.0, %v759
    %v761 = vpop.f32.mrb[0].mxu0
    %v762 = vpop.f32.mrb[0].mxu0
    %v763 = vadd.f32 0.0, %v762
    %v764 = vpop.f32.mrb[0].mxu0
    %765 = vmatprep.mubr.bf16.mxu0 0
    %766 = vmatmul.mubr.bf16.gmra.mrb[0].mxu0 %v720
    %v767 = vpop.f32.mrb[0].mxu0
    %v768 = vadd.f32 0.0, %v767
    %v769 = vpop.f32.mrb[0].mxu0
    %v770 = vpop.f32.mrb[0].mxu0
    %v771 = vadd.f32 0.0, %v770
    %v772 = vpop.f32.mrb[0].mxu0
    %773 = vdwg.mxu0
    %v783 = vunpack.c.l.b16 %v664
    %v784 = vunpack.c.l.b16 %v665
    %v785 = vunpack.c.l.b16 %v666
    %v786 = vunpack.c.l.b16 %v667
    %v787 = vunpack.c.l.b16 %v668
    %v788 = vunpack.c.l.b16 %v669
    %v789 = vunpack.c.l.b16 %v670
    %v790 = vunpack.c.l.b16 %v671
    %v791 = vunpack.c.l.b16 %v672
    %v792 = vpack.c.b16 %v784, %v783
    %v793 = vpack.c.b16 %v786, %v785
    %v794 = vpack.c.b16 %v788, %v787
    %v795 = vpack.c.b16 %v790, %v789
    %v796 = vpack.c.b16 %v791, %v791
    %v802 = vsel %vm105, %v662, 0
    %v805 = vsel %vm105, %v663, 0
    %v808 = vsel %vm112, %v796, 0
    %810 = vmatprep.subr.bf16.mxu0 0
    %811 = vmatpush1.bf16.msra.mxu0 %v792
    %812 = vmatprep.subr.bf16.mxu0 0
    %813 = vmatpush1.bf16.msra.mxu0 %v793
    %814 = vmatprep.subr.bf16.mxu0 0
    %815 = vmatpush1.bf16.msra.mxu0 %v794
    %816 = vmatprep.subr.bf16.mxu0 0
    %817 = vmatpush1.bf16.msra.mxu0 %v795
    %818 = vmatprep.subr.bf16.mxu0 0
    %819 = vmatpush1.bf16.msra.mxu0 %v808
    %820 = vmatprep.subr.bf16.mxu0 0
    %821 = vmatpush1.bf16.msra.mxu0 0
    %822 = vmatprep.subr.bf16.mxu0 0
    %823 = vmatpush1.bf16.msra.mxu0 0
    %824 = vmatprep.subr.bf16.mxu0 0
    %825 = vmatpush1.bf16.msra.mxu0 0
    %826 = vmatprep.subr.bf16.mxu0 0
    %827 = vmatpush1.bf16.msra.mxu0 0
    %828 = vmatprep.subr.bf16.mxu0 0
    %829 = vmatpush1.bf16.msra.mxu0 0
    %830 = vmatprep.subr.bf16.mxu0 0
    %831 = vmatpush1.bf16.msra.mxu0 0
    %832 = vmatprep.subr.bf16.mxu0 0
    %833 = vmatpush1.bf16.msra.mxu0 0
    %834 = vmatprep.subr.bf16.mxu0 0
    %835 = vmatpush1.bf16.msra.mxu0 0
    %836 = vmatprep.subr.bf16.mxu0 0
    %837 = vmatpush1.bf16.msra.mxu0 0
    %838 = vmatprep.subr.bf16.mxu0 0
    %839 = vmatpush1.bf16.msra.mxu0 0
    %840 = vmatprep.subr.bf16.mxu0 0
    %841 = vmatpush1.bf16.msra.mxu0 0
    %842 = vmatprep.mubr.bf16.mxu0 0
    %843 = vmatmul.mubr.bf16.gmra.mrb[0].mxu0 %v802
    %v844 = vpop.f32.mrb[0].mxu0
    %v845 = vadd.f32 %v760, %v844
    %v846 = vpop.f32.mrb[0].mxu0
    %v847 = vpop.f32.mrb[0].mxu0
    %v848 = vadd.f32 %v763, %v847
    %v849 = vpop.f32.mrb[0].mxu0
    %850 = vmatprep.mubr.bf16.mxu0 0
    %851 = vmatmul.mubr.bf16.gmra.mrb[0].mxu0 %v805
    %v852 = vpop.f32.mrb[0].mxu0
    %v853 = vadd.f32 %v768, %v852
    %v854 = vpop.f32.mrb[0].mxu0
    %v855 = vpop.f32.mrb[0].mxu0
    %v856 = vadd.f32 %v771, %v855
    %v857 = vpop.f32.mrb[0].mxu0
    %858 = vdwg.mxu0
    %v859 = vld [vmem:[#allocation2 + $0x2] sm:$0xff]
    %v860 = vld [vmem:[#allocation2 + $0xa] sm:$0xff]
    %v861 = vld [vmem:[#allocation2 + $0x1a] sm:$0xff]
    %v862 = vld [vmem:[#allocation2 + $0x22] sm:$0xff]
    %v863 = vpack.c.bf16 %v860, %v859
    %v864 = vpack.c.bf16 %v862, %v861
    %s865 = scalar_lea.vmem %s2, 72
    %v866 = vld [vmem:[%s865] sm:$0xf]
    %v867 = vld [vmem:[%s865 + $0x4] sm:$0xf]
    %v868 = vld [vmem:[%s865 + $0x8] sm:$0xf]
    %v869 = vld [vmem:[%s865 + $0xc] sm:$0xf]
    %v870 = vld [vmem:[%s865 + $0x10] sm:$0xf]
    %v871 = vld [vmem:[%s865 + $0x14] sm:$0xf]
    %v872 = vld [vmem:[%s865 + $0x18] sm:$0xf]
    %v873 = vld [vmem:[%s865 + $0x1c] sm:$0xf]
    %v874 = vld [vmem:[%s865 + $0x20] sm:$0xf]
    %v884 = vunpack.c.l.b16 %v866
    %v885 = vunpack.c.l.b16 %v867
    %v886 = vunpack.c.l.b16 %v868
    %v887 = vunpack.c.l.b16 %v869
    %v888 = vunpack.c.l.b16 %v870
    %v889 = vunpack.c.l.b16 %v871
    %v890 = vunpack.c.l.b16 %v872
    %v891 = vunpack.c.l.b16 %v873
    %v892 = vunpack.c.l.b16 %v874
    %v893 = vpack.c.b16 %v885, %v884
    %v894 = vpack.c.b16 %v887, %v886
    %v895 = vpack.c.b16 %v889, %v888
    %v896 = vpack.c.b16 %v891, %v890
    %v897 = vpack.c.b16 %v892, %v892
    %v903 = vsel %vm105, %v863, 0
    %v906 = vsel %vm105, %v864, 0
    %v909 = vsel %vm112, %v897, 0
    %911 = vmatprep.subr.bf16.mxu0 0
    %912 = vmatpush1.bf16.msra.mxu0 %v893
    %913 = vmatprep.subr.bf16.mxu0 0
    %914 = vmatpush1.bf16.msra.mxu0 %v894
    %915 = vmatprep.subr.bf16.mxu0 0
    %916 = vmatpush1.bf16.msra.mxu0 %v895
    %917 = vmatprep.subr.bf16.mxu0 0
    %918 = vmatpush1.bf16.msra.mxu0 %v896
    %919 = vmatprep.subr.bf16.mxu0 0
    %920 = vmatpush1.bf16.msra.mxu0 %v909
    %921 = vmatprep.subr.bf16.mxu0 0
    %922 = vmatpush1.bf16.msra.mxu0 0
    %923 = vmatprep.subr.bf16.mxu0 0
    %924 = vmatpush1.bf16.msra.mxu0 0
    %925 = vmatprep.subr.bf16.mxu0 0
    %926 = vmatpush1.bf16.msra.mxu0 0
    %927 = vmatprep.subr.bf16.mxu0 0
    %928 = vmatpush1.bf16.msra.mxu0 0
    %929 = vmatprep.subr.bf16.mxu0 0
    %930 = vmatpush1.bf16.msra.mxu0 0
    %931 = vmatprep.subr.bf16.mxu0 0
    %932 = vmatpush1.bf16.msra.mxu0 0
    %933 = vmatprep.subr.bf16.mxu0 0
    %934 = vmatpush1.bf16.msra.mxu0 0
    %935 = vmatprep.subr.bf16.mxu0 0
    %936 = vmatpush1.bf16.msra.mxu0 0
    %937 = vmatprep.subr.bf16.mxu0 0
    %938 = vmatpush1.bf16.msra.mxu0 0
    %939 = vmatprep.subr.bf16.mxu0 0
    %940 = vmatpush1.bf16.msra.mxu0 0
    %941 = vmatprep.subr.bf16.mxu0 0
    %942 = vmatpush1.bf16.msra.mxu0 0
    %943 = vmatprep.mubr.bf16.mxu0 0
    %944 = vmatmul.mubr.bf16.gmra.mrb[0].mxu0 %v903
    %v945 = vpop.f32.mrb[0].mxu0
    %v946 = vadd.f32 0.0, %v945
    %v947 = vpop.f32.mrb[0].mxu0
    %v948 = vpop.f32.mrb[0].mxu0
    %v949 = vadd.f32 0.0, %v948
    %v950 = vpop.f32.mrb[0].mxu0
    %951 = vmatprep.mubr.bf16.mxu0 0
    %952 = vmatmul.mubr.bf16.gmra.mrb[0].mxu0 %v906
    %v953 = vpop.f32.mrb[0].mxu0
    %v954 = vadd.f32 0.0, %v953
    %v955 = vpop.f32.mrb[0].mxu0
    %v956 = vpop.f32.mrb[0].mxu0
    %v957 = vadd.f32 0.0, %v956
    %v958 = vpop.f32.mrb[0].mxu0
    %959 = vdwg.mxu0
    %v960 = vadd.f32 %v845, %v946
    %v961 = vadd.f32 %v848, %v949
    %v962 = vadd.f32 %v853, %v954
    %v963 = vadd.f32 %v856, %v957
    %v964 = vadd.f32 %v960, %v961
    %v965 = vadd.f32 %v964, %v962
    %v966 = vadd.f32 %v965, %v963
    %v967 = vrot.slane %v966, 4
    %v968 = vadd.f32 %v966, %v967
    %v969 = vrot.slane %v968, 2
    %v970 = vadd.f32 %v968, %v969
    %v971 = vrot.slane %v970, 1
    %v972 = vadd.f32 %v970, %v971
    %v973 = vmul.f32 %v960, %v960
    %v974 = vmul.f32 %v961, %v961
    %v975 = vmul.f32 %v962, %v962
    %v976 = vmul.f32 %v963, %v963
    %v977 = vadd.f32 %v973, %v974
    %v978 = vadd.f32 %v977, %v975
    %v979 = vadd.f32 %v978, %v976
    %v980 = vrot.slane %v979, 4
    %v981 = vadd.f32 %v979, %v980
    %v982 = vrot.slane %v981, 2
    %v983 = vadd.f32 %v981, %v982
    %v984 = vrot.slane %v983, 1
    %v985 = vadd.f32 %v983, %v984
    %v986 = vsel %vm405, %v972, %v985
    %v987 = vld [vmem:[%s9] sm:$0xff]
    %v988 = vld [vmem:[%s9 + $0x8] sm:$0xff]
    %v989 = vld [vmem:[%s9 + $0x10] sm:$0xff]
    %v990 = vld [vmem:[%s9 + $0x18] sm:$0xff]
    %v991 = vld [vmem:[%s9 + $0x20] sm:$0xff]
    %v992 = vld [vmem:[%s9 + $0x28] sm:$0xff]
    %v993 = vld [vmem:[%s9 + $0x30] sm:$0xff]
    %v994 = vld [vmem:[%s9 + $0x38] sm:$0xff]
    %v995 = vld [vmem:[%s9 + $0x40] sm:$0xff]
    %v996 = vld [vmem:[%s9 + $0x48] sm:$0xff]
    %v997 = vld [vmem:[%s9 + $0x50] sm:$0xff]
    %v998 = vld [vmem:[%s9 + $0x58] sm:$0xff]
    %v999 = vld [vmem:[%s9 + $0x60] sm:$0xff]
    %v1000 = vld [vmem:[%s9 + $0x68] sm:$0xff]
    %v1001 = vld [vmem:[%s9 + $0x70] sm:$0xff]
    %v1002 = vld [vmem:[%s9 + $0x78] sm:$0xff]
    %1003 = vmatprep.subr.mxu0 0.0
    %1004 = vmatpush1.msra.mxu0 %v987
    %1005 = vmatprep.subr.mxu0 0.0
    %1006 = vmatpush1.msra.mxu0 %v988
    %1007 = vmatprep.subr.mxu0 0.0
    %1008 = vmatpush1.msra.mxu0 %v989
    %1009 = vmatprep.subr.mxu0 0.0
    %1010 = vmatpush1.msra.mxu0 %v990
    %1011 = vmatprep.subr.mxu0 0.0
    %1012 = vmatpush1.msra.mxu0 %v991
    %1013 = vmatprep.subr.mxu0 0.0
    %1014 = vmatpush1.msra.mxu0 %v992
    %1015 = vmatprep.subr.mxu0 0.0
    %1016 = vmatpush1.msra.mxu0 %v993
    %1017 = vmatprep.subr.mxu0 0.0
    %1018 = vmatpush1.msra.mxu0 %v994
    %1019 = vmatprep.subr.mxu0 0.0
    %1020 = vmatpush1.msra.mxu0 %v995
    %1021 = vmatprep.subr.mxu0 0.0
    %1022 = vmatpush1.msra.mxu0 %v996
    %1023 = vmatprep.subr.mxu0 0.0
    %1024 = vmatpush1.msra.mxu0 %v997
    %1025 = vmatprep.subr.mxu0 0.0
    %1026 = vmatpush1.msra.mxu0 %v998
    %1027 = vmatprep.subr.mxu0 0.0
    %1028 = vmatpush1.msra.mxu0 %v999
    %1029 = vmatprep.subr.mxu0 0.0
    %1030 = vmatpush1.msra.mxu0 %v1000
    %1031 = vmatprep.subr.mxu0 0.0
    %1032 = vmatpush1.msra.mxu0 %v1001
    %1033 = vmatprep.subr.mxu0 0.0
    %1034 = vmatpush1.msra.mxu0 %v1002
    %1035 = vmatprep.subr.mxu0 0.0
    %1036 = vmatpush1.msra.mxu0 0.0
    %1037 = vmatprep.subr.mxu0 0.0
    %1038 = vmatpush1.msra.mxu0 0.0
    %1039 = vmatprep.subr.mxu0 0.0
    %1040 = vmatpush1.msra.mxu0 0.0
    %1041 = vmatprep.subr.mxu0 0.0
    %1042 = vmatpush1.msra.mxu0 0.0
    %1043 = vmatprep.subr.mxu0 0.0
    %1044 = vmatpush1.msra.mxu0 0.0
    %1045 = vmatprep.subr.mxu0 0.0
    %1046 = vmatpush1.msra.mxu0 0.0
    %1047 = vmatprep.subr.mxu0 0.0
    %1048 = vmatpush1.msra.mxu0 0.0
    %1049 = vmatprep.subr.mxu0 0.0
    %1050 = vmatpush1.msra.mxu0 0.0
    %1051 = vmatprep.subr.mxu0 0.0
    %1052 = vmatpush1.msra.mxu0 0.0
    %1053 = vmatprep.subr.mxu0 0.0
    %1054 = vmatpush1.msra.mxu0 0.0
    %1055 = vmatprep.subr.mxu0 0.0
    %1056 = vmatpush1.msra.mxu0 0.0
    %1057 = vmatprep.subr.mxu0 0.0
    %1058 = vmatpush1.msra.mxu0 0.0
    %1059 = vmatprep.subr.mxu0 0.0
    %1060 = vmatpush1.msra.mxu0 0.0
    %1061 = vmatprep.subr.mxu0 0.0
    %1062 = vmatpush1.msra.mxu0 0.0
    %1063 = vmatprep.subr.mxu0 0.0
    %1064 = vmatpush1.msra.mxu0 0.0
    %1065 = vmatprep.subr.mxu0 0.0
    %1066 = vmatpush1.msra.mxu0 0.0
    %1067 = vmatprep.mubr.f32.mxu0 0.0
    %1068 = vmatmul.mubr.f32.gmra.mrb[0].mxu0 %v986
    %v1069 = vpop.f32.mrb[0].mxu0
    %v1070 = vadd.f32 0.0, %v1069
    %v1071 = vpop.f32.mrb[0].mxu0
    %1072 = vdwg.mxu0
    %v1073 = vmul.f32 %v1070, 0.001953125
    %v1074 = vmul.f32 %v1073, %v1073
    %v1076 = vrot.slane %v1074, 7
    %v1078 = vsub.f32 %v1073, %v1076
    %v1079 = vld [vmem:[%s5] sm:$0x1]
    %v1080 = vadd.f32 %v1078, 1e-05
    %v1081 = vrsqrt.pop %v1080
    %v1084 = vunpack.c.l.s4 1966171168
    %v1085 = vunpack.c.0.s8 %v1084
    %v1086 = vlaneseq
    %v1087 = vshrl.u32 %v1086, 7
    %v1088 = vsub.s32 %v1085, %v1087
    %v1089 = vrot.slane %v1081, %v1088
    %v1090 = vcombine.high %v1089, %v1089
    %v1092 = vunpack.c.l.s4 1966171168
    %v1093 = vunpack.c.0.s8 %v1092
    %v1094 = vlaneseq
    %v1095 = vshrl.u32 %v1094, 7
    %v1096 = vsub.s32 %v1093, %v1095
    %v1097 = vrot.slane %v1090, %v1096
    %v1099 = vmul.f32 %v1079, %v1097
    %v1100 = vld [vmem:[%s6] sm:$0x1]
    %v1101 = vmul.f32 %v1073, %v1099
    %v1102 = vsub.f32 %v1100, %v1101
    %v1104 = vlaneseq
    %v1105 = vshrl.u32 %v1104, 7
    %v1106 = vsub.s32 0, %v1105
    %v1107 = vrot.slane %v1102, %v1106
    %v1109 = vsel %vm405, %v1099, %v1107
    %v1110 = vld [vmem:[%s10] sm:$0xff]
    %vm1111 = vcmask 64512
    %v1113 = vsel %vm1111, %v1109, 0
    %1115 = vmatprep.subr.mxu0 0.0
    %1116 = vmatpush1.msra.mxu0 %v1110
    %1117 = vmatprep.subr.mxu0 0.0
    %1118 = vmatpush1.msra.mxu0 0.0
    %1119 = vmatprep.subr.mxu0 0.0
    %1120 = vmatpush1.msra.mxu0 0.0
    %1121 = vmatprep.subr.mxu0 0.0
    %1122 = vmatpush1.msra.mxu0 0.0
    %1123 = vmatprep.subr.mxu0 0.0
    %1124 = vmatpush1.msra.mxu0 0.0
    %1125 = vmatprep.subr.mxu0 0.0
    %1126 = vmatpush1.msra.mxu0 0.0
    %1127 = vmatprep.subr.mxu0 0.0
    %1128 = vmatpush1.msra.mxu0 0.0
    %1129 = vmatprep.subr.mxu0 0.0
    %1130 = vmatpush1.msra.mxu0 0.0
    %1131 = vmatprep.subr.mxu0 0.0
    %1132 = vmatpush1.msra.mxu0 0.0
    %1133 = vmatprep.subr.mxu0 0.0
    %1134 = vmatpush1.msra.mxu0 0.0
    %1135 = vmatprep.subr.mxu0 0.0
    %1136 = vmatpush1.msra.mxu0 0.0
    %1137 = vmatprep.subr.mxu0 0.0
    %1138 = vmatpush1.msra.mxu0 0.0
    %1139 = vmatprep.subr.mxu0 0.0
    %1140 = vmatpush1.msra.mxu0 0.0
    %1141 = vmatprep.subr.mxu0 0.0
    %1142 = vmatpush1.msra.mxu0 0.0
    %1143 = vmatprep.subr.mxu0 0.0
    %1144 = vmatpush1.msra.mxu0 0.0
    %1145 = vmatprep.subr.mxu0 0.0
    %1146 = vmatpush1.msra.mxu0 0.0
    %1147 = vmatprep.subr.mxu0 0.0
    %1148 = vmatpush1.msra.mxu0 0.0
    %1149 = vmatprep.subr.mxu0 0.0
    %1150 = vmatpush1.msra.mxu0 0.0
    %1151 = vmatprep.subr.mxu0 0.0
    %1152 = vmatpush1.msra.mxu0 0.0
    %1153 = vmatprep.subr.mxu0 0.0
    %1154 = vmatpush1.msra.mxu0 0.0
    %1155 = vmatprep.subr.mxu0 0.0
    %1156 = vmatpush1.msra.mxu0 0.0
    %1157 = vmatprep.subr.mxu0 0.0
    %1158 = vmatpush1.msra.mxu0 0.0
    %1159 = vmatprep.subr.mxu0 0.0
    %1160 = vmatpush1.msra.mxu0 0.0
    %1161 = vmatprep.subr.mxu0 0.0
    %1162 = vmatpush1.msra.mxu0 0.0
    %1163 = vmatprep.subr.mxu0 0.0
    %1164 = vmatpush1.msra.mxu0 0.0
    %1165 = vmatprep.subr.mxu0 0.0
    %1166 = vmatpush1.msra.mxu0 0.0
    %1167 = vmatprep.subr.mxu0 0.0
    %1168 = vmatpush1.msra.mxu0 0.0
    %1169 = vmatprep.subr.mxu0 0.0
    %1170 = vmatpush1.msra.mxu0 0.0
    %1171 = vmatprep.subr.mxu0 0.0
    %1172 = vmatpush1.msra.mxu0 0.0
    %1173 = vmatprep.subr.mxu0 0.0
    %1174 = vmatpush1.msra.mxu0 0.0
    %1175 = vmatprep.subr.mxu0 0.0
    %1176 = vmatpush1.msra.mxu0 0.0
    %1177 = vmatprep.subr.mxu0 0.0
    %1178 = vmatpush1.msra.mxu0 0.0
    %1179 = vmatprep.mubr.f32.mxu0 0.0
    %1180 = vmatmul.mubr.f32.gmra.mrb[0].mxu0 %v1113
    %v1181 = vpop.f32.mrb[0].mxu0
    %v1182 = vadd.f32 0.0, %v1181
    %v1183 = vpop.f32.mrb[0].mxu0
    %1184 = vdwg.mxu0
    %v1185 = vlaneseq
    %v1186 = vshrl.u32 %v1185, 7
    %v1187 = vsub.s32 0, %v1186
    %v1188 = vrot.slane %v1182, %v1187
    %v1189 = vmul.f32 %v960, %v1188
    %v1190 = vmul.f32 %v961, %v1188
    %v1191 = vmul.f32 %v962, %v1188
    %v1192 = vmul.f32 %v963, %v1188
    %v1193 = vlaneseq
    %v1194 = vshrl.u32 %v1193, 7
    %v1195 = vsub.s32 1, %v1194
    %v1196 = vrot.slane %v1182, %v1195
    %v1197 = vadd.f32 %v1189, %v1196
    %v1198 = vadd.f32 %v1190, %v1196
    %v1199 = vadd.f32 %v1191, %v1196
    %v1200 = vadd.f32 %v1192, %v1196
    %v1201 = vmax.f32 %v1197, 0.0
    %v1202 = vmax.f32 %v1198, 0.0
    %v1203 = vmax.f32 %v1199, 0.0
    %v1204 = vmax.f32 %v1200, 0.0
    %v1209 = vcombine.high %v1201, %v1201
    %v1211 = vunpack.c.l.s4 1983009808
    %v1212 = vunpack.c.0.s8 %v1211
    %v1213 = vlaneseq
    %v1214 = vshrl.u32 %v1213, 7
    %v1215 = vsub.s32 %v1212, %v1214
    %v1216 = vrot.slane %v1201, %v1215
    %v1218 = vunpack.c.l.s4 1983009808
    %v1219 = vunpack.c.0.s8 %v1218
    %v1220 = vlaneseq
    %v1221 = vshrl.u32 %v1220, 7
    %v1222 = vsub.s32 %v1219, %v1221
    %v1223 = vrot.slane %v1209, %v1222
    %v1224 = vcombine.high %v1216, %v1216
    %v1225 = vcombine.high %v1223, %v1223
    %v1226 = vcombine.high %v1202, %v1202
    %v1228 = vunpack.c.l.s4 1983009808
    %v1229 = vunpack.c.0.s8 %v1228
    %v1230 = vlaneseq
    %v1231 = vshrl.u32 %v1230, 7
    %v1232 = vsub.s32 %v1229, %v1231
    %v1233 = vrot.slane %v1202, %v1232
    %v1235 = vunpack.c.l.s4 1983009808
    %v1236 = vunpack.c.0.s8 %v1235
    %v1237 = vlaneseq
    %v1238 = vshrl.u32 %v1237, 7
    %v1239 = vsub.s32 %v1236, %v1238
    %v1240 = vrot.slane %v1226, %v1239
    %v1241 = vcombine.high %v1233, %v1233
    %v1242 = vcombine.high %v1240, %v1240
    %v1243 = vcombine.high %v1203, %v1203
    %v1245 = vunpack.c.l.s4 1983009808
    %v1246 = vunpack.c.0.s8 %v1245
    %v1247 = vlaneseq
    %v1248 = vshrl.u32 %v1247, 7
    %v1249 = vsub.s32 %v1246, %v1248
    %v1250 = vrot.slane %v1203, %v1249
    %v1252 = vunpack.c.l.s4 1983009808
    %v1253 = vunpack.c.0.s8 %v1252
    %v1254 = vlaneseq
    %v1255 = vshrl.u32 %v1254, 7
    %v1256 = vsub.s32 %v1253, %v1255
    %v1257 = vrot.slane %v1243, %v1256
    %v1258 = vcombine.high %v1250, %v1250
    %v1259 = vcombine.high %v1257, %v1257
    %v1260 = vcombine.high %v1204, %v1204
    %v1262 = vunpack.c.l.s4 1983009808
    %v1263 = vunpack.c.0.s8 %v1262
    %v1264 = vlaneseq
    %v1265 = vshrl.u32 %v1264, 7
    %v1266 = vsub.s32 %v1263, %v1265
    %v1267 = vrot.slane %v1204, %v1266
    %v1269 = vunpack.c.l.s4 1983009808
    %v1270 = vunpack.c.0.s8 %v1269
    %v1271 = vlaneseq
    %v1272 = vshrl.u32 %v1271, 7
    %v1273 = vsub.s32 %v1270, %v1272
    %v1274 = vrot.slane %v1260, %v1273
    %v1275 = vcombine.high %v1267, %v1267
    %v1276 = vcombine.high %v1274, %v1274
    %vm1293 = vcmask 1041408
    %v1294 = vsel %vm1293, %v1216, -inf
    %v1295 = vrot.slane %v1294, 4
    %v1296 = vmax.f32 %v1294, %v1295
    %v1297 = vrot.slane %v1296, 2
    %v1298 = vmax.f32 %v1296, %v1297
    %v1299 = vrot.slane %v1298, 1
    %v1300 = vmax.f32 %v1298, %v1299
    %v1301 = vsel %vm1293, %v1224, -inf
    %v1302 = vrot.slane %v1301, 4
    %v1303 = vmax.f32 %v1301, %v1302
    %v1304 = vrot.slane %v1303, 2
    %v1305 = vmax.f32 %v1303, %v1304
    %v1306 = vrot.slane %v1305, 1
    %v1307 = vmax.f32 %v1305, %v1306
    %v1308 = vsel %vm1293, %v1223, -inf
    %v1309 = vrot.slane %v1308, 4
    %v1310 = vmax.f32 %v1308, %v1309
    %v1311 = vrot.slane %v1310, 2
    %v1312 = vmax.f32 %v1310, %v1311
    %v1313 = vrot.slane %v1312, 1
    %v1314 = vmax.f32 %v1312, %v1313
    %v1315 = vsel %vm1293, %v1225, -inf
    %v1316 = vrot.slane %v1315, 4
    %v1317 = vmax.f32 %v1315, %v1316
    %v1318 = vrot.slane %v1317, 2
    %v1319 = vmax.f32 %v1317, %v1318
    %v1320 = vrot.slane %v1319, 1
    %v1321 = vmax.f32 %v1319, %v1320
    %v1322 = vsel %vm1293, %v1233, -inf
    %v1323 = vrot.slane %v1322, 4
    %v1324 = vmax.f32 %v1322, %v1323
    %v1325 = vrot.slane %v1324, 2
    %v1326 = vmax.f32 %v1324, %v1325
    %v1327 = vrot.slane %v1326, 1
    %v1328 = vmax.f32 %v1326, %v1327
    %v1329 = vsel %vm1293, %v1241, -inf
    %v1330 = vrot.slane %v1329, 4
    %v1331 = vmax.f32 %v1329, %v1330
    %v1332 = vrot.slane %v1331, 2
    %v1333 = vmax.f32 %v1331, %v1332
    %v1334 = vrot.slane %v1333, 1
    %v1335 = vmax.f32 %v1333, %v1334
    %v1336 = vsel %vm1293, %v1240, -inf
    %v1337 = vrot.slane %v1336, 4
    %v1338 = vmax.f32 %v1336, %v1337
    %v1339 = vrot.slane %v1338, 2
    %v1340 = vmax.f32 %v1338, %v1339
    %v1341 = vrot.slane %v1340, 1
    %v1342 = vmax.f32 %v1340, %v1341
    %v1343 = vsel %vm1293, %v1242, -inf
    %v1344 = vrot.slane %v1343, 4
    %v1345 = vmax.f32 %v1343, %v1344
    %v1346 = vrot.slane %v1345, 2
    %v1347 = vmax.f32 %v1345, %v1346
    %v1348 = vrot.slane %v1347, 1
    %v1349 = vmax.f32 %v1347, %v1348
    %v1350 = vsel %vm1293, %v1250, -inf
    %v1351 = vrot.slane %v1350, 4
    %v1352 = vmax.f32 %v1350, %v1351
    %v1353 = vrot.slane %v1352, 2
    %v1354 = vmax.f32 %v1352, %v1353
    %v1355 = vrot.slane %v1354, 1
    %v1356 = vmax.f32 %v1354, %v1355
    %v1357 = vsel %vm1293, %v1258, -inf
    %v1358 = vrot.slane %v1357, 4
    %v1359 = vmax.f32 %v1357, %v1358
    %v1360 = vrot.slane %v1359, 2
    %v1361 = vmax.f32 %v1359, %v1360
    %v1362 = vrot.slane %v1361, 1
    %v1363 = vmax.f32 %v1361, %v1362
    %v1364 = vsel %vm1293, %v1257, -inf
    %v1365 = vrot.slane %v1364, 4
    %v1366 = vmax.f32 %v1364, %v1365
    %v1367 = vrot.slane %v1366, 2
    %v1368 = vmax.f32 %v1366, %v1367
    %v1369 = vrot.slane %v1368, 1
    %v1370 = vmax.f32 %v1368, %v1369
    %v1371 = vsel %vm1293, %v1259, -inf
    %v1372 = vrot.slane %v1371, 4
    %v1373 = vmax.f32 %v1371, %v1372
    %v1374 = vrot.slane %v1373, 2
    %v1375 = vmax.f32 %v1373, %v1374
    %v1376 = vrot.slane %v1375, 1
    %v1377 = vmax.f32 %v1375, %v1376
    %v1378 = vsel %vm1293, %v1267, -inf
    %v1379 = vrot.slane %v1378, 4
    %v1380 = vmax.f32 %v1378, %v1379
    %v1381 = vrot.slane %v1380, 2
    %v1382 = vmax.f32 %v1380, %v1381
    %v1383 = vrot.slane %v1382, 1
    %v1384 = vmax.f32 %v1382, %v1383
    %v1385 = vsel %vm1293, %v1275, -inf
    %v1386 = vrot.slane %v1385, 4
    %v1387 = vmax.f32 %v1385, %v1386
    %v1388 = vrot.slane %v1387, 2
    %v1389 = vmax.f32 %v1387, %v1388
    %v1390 = vrot.slane %v1389, 1
    %v1391 = vmax.f32 %v1389, %v1390
    %v1392 = vsel %vm1293, %v1274, -inf
    %v1393 = vrot.slane %v1392, 4
    %v1394 = vmax.f32 %v1392, %v1393
    %v1395 = vrot.slane %v1394, 2
    %v1396 = vmax.f32 %v1394, %v1395
    %v1397 = vrot.slane %v1396, 1
    %v1398 = vmax.f32 %v1396, %v1397
    %v1399 = vsel %vm1293, %v1276, -inf
    %v1400 = vrot.slane %v1399, 4
    %v1401 = vmax.f32 %v1399, %v1400
    %v1402 = vrot.slane %v1401, 2
    %v1403 = vmax.f32 %v1401, %v1402
    %v1404 = vrot.slane %v1403, 1
    %v1405 = vmax.f32 %v1403, %v1404
    %1422 = vrot.lane.b32.xlu0 %v1300, 64
    %v1423 = vpop.permute.xlu0 %1422
    %1424 = vrot.lane.b32.xlu0 %v1307, 64
    %v1425 = vpop.permute.xlu0 %1424
    %1426 = vrot.lane.b32.xlu0 %v1314, 64
    %v1427 = vpop.permute.xlu0 %1426
    %1428 = vrot.lane.b32.xlu0 %v1321, 64
    %v1429 = vpop.permute.xlu0 %1428
    %1430 = vrot.lane.b32.xlu0 %v1328, 64
    %v1431 = vpop.permute.xlu0 %1430
    %1432 = vrot.lane.b32.xlu0 %v1335, 64
    %v1433 = vpop.permute.xlu0 %1432
    %1434 = vrot.lane.b32.xlu0 %v1342, 64
    %v1435 = vpop.permute.xlu0 %1434
    %1436 = vrot.lane.b32.xlu0 %v1349, 64
    %v1437 = vpop.permute.xlu0 %1436
    %1438 = vrot.lane.b32.xlu0 %v1356, 64
    %v1439 = vpop.permute.xlu0 %1438
    %1440 = vrot.lane.b32.xlu0 %v1363, 64
    %v1441 = vpop.permute.xlu0 %1440
    %1442 = vrot.lane.b32.xlu0 %v1370, 64
    %v1443 = vpop.permute.xlu0 %1442
    %1444 = vrot.lane.b32.xlu0 %v1377, 64
    %v1445 = vpop.permute.xlu0 %1444
    %1446 = vrot.lane.b32.xlu0 %v1384, 64
    %v1447 = vpop.permute.xlu0 %1446
    %1448 = vrot.lane.b32.xlu0 %v1391, 64
    %v1449 = vpop.permute.xlu0 %1448
    %1450 = vrot.lane.b32.xlu0 %v1398, 64
    %v1451 = vpop.permute.xlu0 %1450
    %1452 = vrot.lane.b32.xlu0 %v1405, 64
    %v1453 = vpop.permute.xlu0 %1452
    %v1470 = vmax.f32 %v1300, %v1423
    %v1471 = vmax.f32 %v1307, %v1425
    %v1472 = vmax.f32 %v1314, %v1427
    %v1473 = vmax.f32 %v1321, %v1429
    %v1474 = vmax.f32 %v1328, %v1431
    %v1475 = vmax.f32 %v1335, %v1433
    %v1476 = vmax.f32 %v1342, %v1435
    %v1477 = vmax.f32 %v1349, %v1437
    %v1478 = vmax.f32 %v1356, %v1439
    %v1479 = vmax.f32 %v1363, %v1441
    %v1480 = vmax.f32 %v1370, %v1443
    %v1481 = vmax.f32 %v1377, %v1445
    %v1482 = vmax.f32 %v1384, %v1447
    %v1483 = vmax.f32 %v1391, %v1449
    %v1484 = vmax.f32 %v1398, %v1451
    %v1485 = vmax.f32 %v1405, %v1453
    %v1502 = vrot.slane %v1471, 7
    %vm1503 = vcmask 1041409
    %v1504 = vsel %vm1503, %v1502, %v1470
    %v1505 = vrot.slane %v1472, 6
    %vm1506 = vcmask 1042434
    %v1507 = vsel %vm1506, %v1505, %v1504
    %v1508 = vrot.slane %v1473, 5
    %vm1509 = vcmask 1043459
    %v1510 = vsel %vm1509, %v1508, %v1507
    %v1511 = vrot.slane %v1474, 4
    %vm1512 = vcmask 1044484
    %v1513 = vsel %vm1512, %v1511, %v1510
    %v1514 = vrot.slane %v1475, 3
    %vm1515 = vcmask 1045509
    %v1516 = vsel %vm1515, %v1514, %v1513
    %v1517 = vrot.slane %v1476, 2
    %vm1518 = vcmask 1046534
    %v1519 = vsel %vm1518, %v1517, %v1516
    %v1520 = vrot.slane %v1477, 1
    %vm1521 = vcmask 1047559
    %v1522 = vsel %vm1521, %v1520, %v1519
    %v1523 = vrot.slane %v1479, 7
    %v1524 = vsel %vm1503, %v1523, %v1478
    %v1525 = vrot.slane %v1480, 6
    %v1526 = vsel %vm1506, %v1525, %v1524
    %v1527 = vrot.slane %v1481, 5
    %v1528 = vsel %vm1509, %v1527, %v1526
    %v1529 = vrot.slane %v1482, 4
    %v1530 = vsel %vm1512, %v1529, %v1528
    %v1531 = vrot.slane %v1483, 3
    %v1532 = vsel %vm1515, %v1531, %v1530
    %v1533 = vrot.slane %v1484, 2
    %v1534 = vsel %vm1518, %v1533, %v1532
    %v1535 = vrot.slane %v1485, 1
    %v1536 = vsel %vm1521, %v1535, %v1534
    %1539 = vst.msk [vmem:[#allocation3] sm:$0xff] %vm374, %v1522
    %1540 = vst.msk [vmem:[#allocation3 + $0x8] sm:$0xff] %vm374, %v1536
    // Predicated region
    $region46: #{tpu_custom_call.1} parent=1 // pred_check
      _
    $region47: #{tpu_custom_call.1} parent=1 // pred_check_branch
      %1542 = sbr.rel (0) target = $region49
    $region48: #{tpu_custom_call.1} parent=1 // pred_region
      %s1544 = ssub.s32 256, 256
      %1545 = vsyncadd [#allocation4], %s1544
      %s1546 = sshll.u32 [#allocation3], 4
      %s1547 = int_to_ptr.vmem [resolvable:$true] %s1546
      %1552 = dma.vmem_to_hbm [thread:$0]  %s1547, 256, %s11, [#allocation4], 128, 128, 8
    $region49: #{tpu_custom_call.1} parent=1 // pred_fallthru
      _
    // Predicated region
    $region50: #{tpu_custom_call.1} parent=1 // pred_check
      _
    $region51: #{tpu_custom_call.1} parent=1 // pred_check_branch
      %1554 = sbr.rel (0) target = $region53
    $region52: #{tpu_custom_call.1} parent=1 // pred_region
      %1555 = dma.done [#allocation4], 256
    $region53: #{tpu_custom_call.1} parent=1 // pred_fallthru
      _
    %1556 = vsyncpa [#allocation4], 1

</llo_original>
